<compile_context>
chip_gen: v7x
topology: tpu7x:2x2x1
jax: 0.10.0
libtpu: 0.0.40
codegen_flags: <defaults>
</compile_context>

<pallas_src>
import functools

import numpy as np
import jax
import jax.numpy as jnp
from jax import lax
from jax.experimental import pallas as pl
from jax.experimental.pallas import tpu as pltpu


def _round_up(x, m):
    return (x + m - 1) // m * m


def vertex_adder_kernel(sel_i_ref, seljv_ref, btw_ref, ijm_ref, acat_ref, feat_ref,
                        an_ref, pidn_ref, featn_ref, *, n_verts, m_verts):
    f32 = jnp.float32
    N = n_verts
    M = m_verts
    Wa = ijm_ref.shape[1]          # padded output vertex axis (multiple of 128)
    k = pl.program_id(1)

    # ---- init resident accumulators at the first pair-chunk -----------------
    @pl.when(k == 0)
    def _init():
        an_ref[...] = jnp.zeros_like(an_ref)
        pidn_ref[...] = jnp.zeros_like(pidn_ref)
        featn_ref[...] = feat_ref[...]          # dense full-tile store (no sub-tile RMW)

    # ---- precomputed (data-independent) selection tensors for this chunk ----
    sel_i = sel_i_ref[...].astype(f32)          # (TP, N)   one-hot of i_p
    seljv = seljv_ref[...].astype(f32)          # (TP, N)   one-hot of j_p (strict upper only)
    btw = btw_ref[...].astype(f32)              # (TP, N+1) [i_p < lane < j_p | 1]
    ijm = ijm_ref[...].astype(f32)              # (TP, Wa)  one-hot(i_p) + one-hot(j_p)

    acat = acat_ref[...]                        # (N, 2N+2) [A | trunc(A) | excl-cumsum | poly]
    feat_n = feat_ref[pl.ds(0, N), :]           # (N, Fpad) original vertex features

    # ---- one fused MXU gather: mask, insertion count and polygon id ---------
    G = jnp.dot(sel_i, acat, preferred_element_type=f32)            # (TP, 2N+2)
    mask = jnp.sum(G[:, :N] * seljv, axis=1, keepdims=True)         # A[i_p, j_p] (strict upper)
    cnt = jnp.sum(G[:, N:2 * N + 1] * btw, axis=1, keepdims=True)   # #edges inserted before p
    poly = G[:, 2 * N + 1:2 * N + 2]                                 # max_r Pid[r, i_p]
    pmask = poly * mask
    tmask = mask.astype(jnp.int32).astype(f32)                       # torch LongTensor(mask)

    # ---- insertion row (modular running index, as in the reference) ---------
    v = (N + cnt.astype(jnp.int32)) % M                              # (TP, 1)
    lane_m = lax.broadcasted_iota(jnp.int32, (sel_i.shape[0], Wa), 1)
    sel_v = (lane_m == v).astype(f32)                                # (TP, Wa)

    # ---- midpoint features of every pair (one MXU gather) -------------------
    pair_feat = jnp.dot(sel_i + seljv, feat_n, preferred_element_type=f32)   # (TP, Fpad)

    # ---- one fused P-contraction for all three outputs ----------------------
    rhs = jnp.concatenate(
        [mask * ijm, pmask * ijm, (0.5 * tmask) * pair_feat], axis=1)        # (TP, 2Wa+Fpad)
    ta = (((0,), (0,)), ((), ()))
    big = lax.dot_general(sel_v, rhs, ta, preferred_element_type=f32)        # (Wa, 2Wa+Fpad)

    an_ref[...] += big[:, :Wa]
    pidn_ref[...] += big[:, Wa:2 * Wa]
    featn_ref[...] += big[:, 2 * Wa:]

    # ---- symmetrize once at the end (replaces the second P-contraction) -----
    @pl.when(k == pl.num_programs(1) - 1)
    def _symmetrize():
        a = an_ref[...]
        an_ref[...] = a + a.T
        p = pidn_ref[...]
        pidn_ref[...] = p + p.T


def vertex_adder(x_prev, c_prev, A, Pid, s_prev, *, pair_chunk=512):
    """Pallas implementation of VertexAdder.forward (the `toss` attr is unused)."""
    B, N, F = x_prev.shape
    D = c_prev.shape[2]
    Ftot = 2 * F + D
    f32 = jnp.float32

    # final_num_vertices is an output *shape* -> derived host-side from batch
    # element 0, exactly like the reference numpy code.
    n_edges0 = int(np.count_nonzero(np.asarray(A[0]))) // 2
    M = N + n_edges0

    Fpad = _round_up(Ftot, 128)              # lane-dense feature output
    Wa = _round_up(M, 128)                   # padded vertex axis -> dense stores
    P = N * N
    TP = _round_up(min(int(pair_chunk), P), 16)
    P_pad = _round_up(P, TP)
    KP = P_pad // TP

    A32 = A.astype(f32)
    Pid32 = Pid.astype(f32)

    # ---- cheap O(B*N^2) per-batch prep, hoisted into XLA --------------------
    A_cnt = jnp.trunc(A32)                                             # int(A[i,j]) semantics
    upper = jnp.triu(jnp.ones((N, N), f32), k=1)
    rowcnt = jnp.sum(A_cnt * upper[None], axis=-1, keepdims=True)      # (B, N, 1)
    lower = jnp.tril(jnp.ones((N, N), f32), k=-1)
    cumrow = jnp.einsum('ij,bjk->bik', lower, rowcnt)                  # exclusive prefix (B,N,1)
    poly = jnp.max(Pid32, axis=1)[:, :, None]                          # (B, N, 1)
    acat = jnp.concatenate([A32, A_cnt, cumrow, poly], axis=-1)        # (B, N, 2N+2)

    # features [x | c | s], lane-padded to Fpad, row-padded to Wa
    feat = jnp.concatenate([x_prev.astype(f32), c_prev.astype(f32),
                            s_prev.astype(f32)], axis=-1)
    feat = jnp.pad(feat, ((0, 0), (0, Wa - N), (0, Fpad - Ftot)))      # (B, Wa, Fpad)

    # ---- data-independent pair-selection tensors (host, bf16) ---------------
    p_idx = np.arange(P_pad)
    i_idx = p_idx // N
    j_idx = p_idx % N
    valid = ((p_idx < P) & (j_idx > i_idx)).astype(np.float32)[:, None]
    lane_n = np.arange(N)[None, :]
    sel_i_np = (lane_n == i_idx[:, None]).astype(np.float32)                     # (P_pad, N)
    sel_j_np = (lane_n == j_idx[:, None]).astype(np.float32) * valid             # (P_pad, N)
    btw_np = ((lane_n > i_idx[:, None]) & (lane_n < j_idx[:, None])).astype(np.float32)
    btw_np = np.concatenate([btw_np, np.ones((P_pad, 1), np.float32)], axis=1)   # (P_pad, N+1)
    lane_m = np.arange(Wa)[None, :]
    ijm_np = (((lane_m == i_idx[:, None]) | (lane_m == j_idx[:, None]))
              .astype(np.float32) * valid)                                       # (P_pad, Wa)

    bf16 = jnp.bfloat16
    sel_i_b = jnp.asarray(sel_i_np, bf16)
    sel_j_b = jnp.asarray(sel_j_np, bf16)
    btw_b = jnp.asarray(btw_np, bf16)
    ijm_b = jnp.asarray(ijm_np, bf16)

    # ---- generation-aware scoped-VMEM budget (v5e/v6e: 128 MiB, v7x: 64 MiB) -
    try:
        cap = pltpu.get_tpu_info().vmem_capacity_bytes
        vmem_limit = int(min(cap * 3 // 4, 96 * 1024 * 1024))
    except Exception:
        vmem_limit = 48 * 1024 * 1024

    kernel = functools.partial(vertex_adder_kernel, n_verts=N, m_verts=M)
    out_shape = (
        jax.ShapeDtypeStruct((B, Wa, Wa), f32),      # A_new   (padded)
        jax.ShapeDtypeStruct((B, Wa, Wa), f32),      # Pid_new (padded)
        jax.ShapeDtypeStruct((B, Wa, Fpad), f32),    # [x|c|s]_new (padded)
    )
    an, pidn, featn = pl.pallas_call(
        kernel,
        out_shape=out_shape,
        grid=(B, KP),
        in_specs=[
            pl.BlockSpec((TP, N), lambda b, k: (k, 0)),                  # sel_i
            pl.BlockSpec((TP, N), lambda b, k: (k, 0)),                  # sel_j * valid
            pl.BlockSpec((TP, N + 1), lambda b, k: (k, 0)),              # between | 1
            pl.BlockSpec((TP, Wa), lambda b, k: (k, 0)),                 # ij one-hots (padded)
            pl.BlockSpec((None, N, 2 * N + 2), lambda b, k: (b, 0, 0)),  # Acat (per batch)
            pl.BlockSpec((None, Wa, Fpad), lambda b, k: (b, 0, 0)),      # padded features
        ],
        out_specs=(
            pl.BlockSpec((None, Wa, Wa), lambda b, k: (b, 0, 0)),
            pl.BlockSpec((None, Wa, Wa), lambda b, k: (b, 0, 0)),
            pl.BlockSpec((None, Wa, Fpad), lambda b, k: (b, 0, 0)),
        ),
        compiler_params=pltpu.CompilerParams(
            dimension_semantics=("parallel", "arbitrary"),
            vmem_limit_bytes=vmem_limit),
    )(sel_i_b, sel_j_b, btw_b, ijm_b, acat, feat)

    # TODO(synk): for very large B with tiny N, process several batch elements per
    # grid step (batched einsums) to amortize per-step pipeline overhead.
    A_new = an[:, :M, :M]
    Pid_new = pidn[:, :M, :M]
    x_new = featn[:, :M, :F]
    c_new = featn[:, :M, F:F + D]
    s_new = featn[:, :M, F + D:Ftot]
    return x_new, c_new, A_new, Pid_new, s_new


def vertex_adder_reference(x, c, A, Pid, s):
    """NumPy mirror of the torch forward (incl. int-truncation semantics)."""
    x, c, A, Pid, s = (np.asarray(t, np.float64) for t in (x, c, A, Pid, s))
    B, N, F = x.shape
    D = c.shape[2]
    M = int(N + np.count_nonzero(A.reshape(B, -1), axis=1)[0] // 2)
    A_new = np.zeros((B, M, M))
    P_new = np.zeros((B, M, M))
    x_new = np.concatenate([x, np.zeros((B, M - N, F))], axis=1)
    c_new = np.concatenate([c, np.zeros((B, M - N, D))], axis=1)
    s_new = np.concatenate([s, np.zeros((B, M - N, F))], axis=1)
    v_idx = np.full(B, N, dtype=np.int64)
    for i in range(N):
        poly_i = np.max(Pid[:, :, i], axis=-1)
        for j in range(i + 1, N):
            mask = A[:, i, j]
            pmask = poly_i * mask
            tmask = np.trunc(mask)          # torch.LongTensor(mask).type(dtype)
            for b in range(B):
                v = v_idx[b]
                A_new[b, i, v] += mask[b]; A_new[b, v, i] += mask[b]
                A_new[b, v, j] += mask[b]; A_new[b, j, v] += mask[b]
                P_new[b, i, v] += pmask[b]; P_new[b, v, i] += pmask[b]
                P_new[b, v, j] += pmask[b]; P_new[b, j, v] += pmask[b]
                x_new[b, v] += (x[b, i] + x[b, j]) / 2 * tmask[b]
                c_new[b, v] += (c[b, i] + c[b, j]) / 2 * tmask[b]
                s_new[b, v] += (s[b, i] + s[b, j]) / 2 * tmask[b]
                v_idx[b] = (v_idx[b] + int(mask[b])) % M
    return (x_new.astype(np.float32), c_new.astype(np.float32),
            A_new.astype(np.float32), P_new.astype(np.float32),
            s_new.astype(np.float32))


if __name__ == "__main__":
    B, N, F, D = 2, 8, 4, 3

    # Deterministic symmetric binary adjacency, 8 edges per batch element.
    edges0 = [(0, 1), (1, 2), (2, 3), (3, 4), (4, 5), (5, 6), (6, 7), (0, 7)]
    edges1 = [(0, 2), (1, 3), (2, 4), (3, 5), (4, 6), (5, 7), (0, 4), (1, 5)]
    A_np = np.zeros((B, N, N), np.float32)
    for (i, j) in edges0:
        A_np[0, i, j] = A_np[0, j, i] = 1.0
    for (i, j) in edges1:
        A_np[1, i, j] = A_np[1, j, i] = 1.0

    key = jax.random.PRNGKey(0)
    kx, kc, ks, kp = jax.random.split(key, 4)
    x_prev = jax.random.normal(kx, (B, N, F), dtype=jnp.float32)
    c_prev = jax.random.normal(kc, (B, N, D), dtype=jnp.float32)
    s_prev = jax.random.normal(ks, (B, N, F), dtype=jnp.float32)
    Pid = jax.random.randint(kp, (B, N, N), 0, 4).astype(jnp.float32)
    A = jnp.asarray(A_np)

    outs = vertex_adder(x_prev, c_prev, A, Pid, s_prev)
    outs = jax.block_until_ready(outs)

    refs = vertex_adder_reference(x_prev, c_prev, A, Pid, s_prev)
    for got, want in zip(outs, refs):
        np.testing.assert_allclose(np.asarray(got), want, rtol=1e-5, atol=1e-5)

    print("KERNEL_OK")
</pallas_src>

<mosaic_0001>
module attributes {stable_mosaic.version = 11 : i64} {
  func.func @vertex_adder_kernel(%arg0: i32, %arg1: i32, %arg2: memref<64x8xbf16, #tpu.memory_space<vmem>>, %arg3: memref<64x8xbf16, #tpu.memory_space<vmem>>, %arg4: memref<64x9xbf16, #tpu.memory_space<vmem>>, %arg5: memref<64x128xbf16, #tpu.memory_space<vmem>>, %arg6: memref<1x8x18xf32, #tpu.memory_space<vmem>>, %arg7: memref<1x128x128xf32, #tpu.memory_space<vmem>>, %arg8: memref<1x128x128xf32, #tpu.memory_space<vmem>>, %arg9: memref<1x128x128xf32, #tpu.memory_space<vmem>>, %arg10: memref<1x128x128xf32, #tpu.memory_space<vmem>>) attributes {dimension_semantics = [#tpu.dimension_semantics<parallel>, #tpu.dimension_semantics<arbitrary>], iteration_bounds = array<i64: 2, 1>, scalar_prefetch = 0 : i64, scratch_operands = 0 : i64, tpu.core_type = #tpu.core_type<tc>, window_params = [{transform_indices = @transform_0, window_bounds = array<i64: 64, 8>}, {transform_indices = @transform_1, window_bounds = array<i64: 64, 8>}, {transform_indices = @transform_2, window_bounds = array<i64: 64, 9>}, {transform_indices = @transform_3, window_bounds = array<i64: 64, 128>}, {transform_indices = @transform_4, window_bounds = array<i64: 1, 8, 18>}, {transform_indices = @transform_5, window_bounds = array<i64: 1, 128, 128>}, {transform_indices = @transform_6, window_bounds = array<i64: 1, 128, 128>}, {transform_indices = @transform_7, window_bounds = array<i64: 1, 128, 128>}, {transform_indices = @transform_8, window_bounds = array<i64: 1, 128, 128>}]} {
    %c0_i32 = arith.constant 0 : i32
    %0 = arith.cmpi eq, %arg1, %c0_i32 : i32
    %1 = arith.extui %0 : i1 to i32
    %c0_i32_0 = arith.constant 0 : i32
    %2 = arith.cmpi ne, %1, %c0_i32_0 : i32
    scf.if %2 {
      %cst_43 = arith.constant 0.000000e+00 : f32
      %88 = vector.broadcast %cst_43 : f32 to vector<128x128xf32>
      %c0_44 = arith.constant 0 : index
      %c0_45 = arith.constant 0 : index
      %c0_46 = arith.constant 0 : index
      %89 = vector.load %arg8[%c0_44, %c0_45, %c0_46] : memref<1x128x128xf32, #tpu.memory_space<vmem>>, vector<1x128x128xf32>
      %90 = vector.shape_cast %89 : vector<1x128x128xf32> to vector<128x128xf32>
      %91 = vector.shape_cast %88 : vector<128x128xf32> to vector<1x128x128xf32>
      tpu.vector_store %arg8[%c0_44, %c0_45, %c0_46], %91 {strides = array<i32>} : memref<1x128x128xf32, #tpu.memory_space<vmem>>, vector<1x128x128xf32>,
      %cst_47 = arith.constant 0.000000e+00 : f32
      %92 = vector.broadcast %cst_47 : f32 to vector<128x128xf32>
      %c0_48 = arith.constant 0 : index
      %c0_49 = arith.constant 0 : index
      %c0_50 = arith.constant 0 : index
      %93 = vector.load %arg9[%c0_48, %c0_49, %c0_50] : memref<1x128x128xf32, #tpu.memory_space<vmem>>, vector<1x128x128xf32>
      %94 = vector.shape_cast %93 : vector<1x128x128xf32> to vector<128x128xf32>
      %95 = vector.shape_cast %92 : vector<128x128xf32> to vector<1x128x128xf32>
      tpu.vector_store %arg9[%c0_48, %c0_49, %c0_50], %95 {strides = array<i32>} : memref<1x128x128xf32, #tpu.memory_space<vmem>>, vector<1x128x128xf32>,
      %c0_51 = arith.constant 0 : index
      %c0_52 = arith.constant 0 : index
      %c0_53 = arith.constant 0 : index
      %96 = vector.load %arg7[%c0_51, %c0_52, %c0_53] : memref<1x128x128xf32, #tpu.memory_space<vmem>>, vector<1x128x128xf32>
      %97 = vector.shape_cast %96 : vector<1x128x128xf32> to vector<128x128xf32>
      %c0_54 = arith.constant 0 : index
      %c0_55 = arith.constant 0 : index
      %c0_56 = arith.constant 0 : index
      %98 = vector.load %arg10[%c0_54, %c0_55, %c0_56] : memref<1x128x128xf32, #tpu.memory_space<vmem>>, vector<1x128x128xf32>
      %99 = vector.shape_cast %98 : vector<1x128x128xf32> to vector<128x128xf32>
      %100 = vector.shape_cast %97 : vector<128x128xf32> to vector<1x128x128xf32>
      tpu.vector_store %arg10[%c0_54, %c0_55, %c0_56], %100 {strides = array<i32>} : memref<1x128x128xf32, #tpu.memory_space<vmem>>, vector<1x128x128xf32>,
    } else {
    }
    %c0 = arith.constant 0 : index
    %c0_1 = arith.constant 0 : index
    %3 = vector.load %arg2[%c0, %c0_1] : memref<64x8xbf16, #tpu.memory_space<vmem>>, vector<64x8xbf16>
    %4 = arith.extf %3 : vector<64x8xbf16> to vector<64x8xf32>
    %c0_2 = arith.constant 0 : index
    %c0_3 = arith.constant 0 : index
    %5 = vector.load %arg3[%c0_2, %c0_3] : memref<64x8xbf16, #tpu.memory_space<vmem>>, vector<64x8xbf16>
    %6 = arith.extf %5 : vector<64x8xbf16> to vector<64x8xf32>
    %c0_4 = arith.constant 0 : index
    %c0_5 = arith.constant 0 : index
    %7 = vector.load %arg4[%c0_4, %c0_5] : memref<64x9xbf16, #tpu.memory_space<vmem>>, vector<64x9xbf16>
    %8 = arith.extf %7 : vector<64x9xbf16> to vector<64x9xf32>
    %c0_6 = arith.constant 0 : index
    %c0_7 = arith.constant 0 : index
    %9 = vector.load %arg5[%c0_6, %c0_7] : memref<64x128xbf16, #tpu.memory_space<vmem>>, vector<64x128xbf16>
    %10 = arith.extf %9 : vector<64x128xbf16> to vector<64x128xf32>
    %c0_8 = arith.constant 0 : index
    %c0_9 = arith.constant 0 : index
    %c0_10 = arith.constant 0 : index
    %11 = vector.load %arg6[%c0_8, %c0_9, %c0_10] : memref<1x8x18xf32, #tpu.memory_space<vmem>>, vector<1x8x18xf32>
    %12 = vector.shape_cast %11 : vector<1x8x18xf32> to vector<8x18xf32>
    %c0_11 = arith.constant 0 : index
    %c0_12 = arith.constant 0 : index
    %c0_13 = arith.constant 0 : index
    %13 = vector.load %arg7[%c0_11, %c0_12, %c0_13] : memref<1x128x128xf32, #tpu.memory_space<vmem>>, vector<1x8x128xf32>
    %14 = vector.shape_cast %13 : vector<1x8x128xf32> to vector<8x128xf32>
    %cst = arith.constant dense<0.000000e+00> : vector<64x18xf32>
    %15 = tpu.matmul %4, %12, %cst {dimension_numbers = #tpu.dot_dimension_numbers<[1], [0], [0], [1], [0, 0, 1, 1], [], []>} : vector<64x8xf32>, vector<8x18xf32>, vector<64x18xf32> -> vector<64x18xf32>
    %16 = vector.extract_strided_slice %15 {offsets = [0, 0], sizes = [64, 8], strides = [1, 1]} : vector<64x18xf32> to vector<64x8xf32>
    %17 = arith.mulf %16, %6 : vector<64x8xf32>
    %cst_14 = arith.constant dense<0.000000e+00> : vector<64xf32>
    %18 = vector.multi_reduction <add>, %17, %cst_14 [1] : vector<64x8xf32> to vector<64xf32>
    %19 = vector.shape_cast %18 : vector<64xf32> to vector<64x1xf32>
    %20 = vector.extract_strided_slice %15 {offsets = [0, 8], sizes = [64, 9], strides = [1, 1]} : vector<64x18xf32> to vector<64x9xf32>
    %21 = arith.mulf %20, %8 : vector<64x9xf32>
    %cst_15 = arith.constant dense<0.000000e+00> : vector<64xf32>
    %22 = vector.multi_reduction <add>, %21, %cst_15 [1] : vector<64x9xf32> to vector<64xf32>
    %23 = vector.shape_cast %22 : vector<64xf32> to vector<64x1xf32>
    %24 = vector.extract_strided_slice %15 {offsets = [0, 17], sizes = [64, 1], strides = [1, 1]} : vector<64x18xf32> to vector<64x1xf32>
    %25 = arith.mulf %24, %19 : vector<64x1xf32>
    %26 = arith.fptosi %19 : vector<64x1xf32> to vector<64x1xi32>
    %27 = arith.sitofp %26 : vector<64x1xi32> to vector<64x1xf32>
    %28 = arith.fptosi %23 : vector<64x1xf32> to vector<64x1xi32>
    %c8_i32 = arith.constant 8 : i32
    %29 = vector.broadcast %c8_i32 : i32 to vector<64x1xi32>
    %30 = arith.addi %29, %28 : vector<64x1xi32>
    %c16_i32 = arith.constant 16 : i32
    %c0_i32_16 = arith.constant 0 : i32
    %31 = arith.cmpi eq, %c16_i32, %c0_i32_16 : i32
    %c1_i32 = arith.constant 1 : i32
    %32 = arith.select %31, %c1_i32, %c16_i32 : i32
    %33 = vector.broadcast %32 : i32 to vector<64x1xi32>
    %34 = arith.remsi %30, %33 : vector<64x1xi32>
    %c0_i32_17 = arith.constant 0 : i32
    %35 = vector.broadcast %c0_i32_17 : i32 to vector<64x1xi32>
    %36 = arith.cmpi ne, %34, %35 : vector<64x1xi32>
    %c0_i32_18 = arith.constant 0 : i32
    %37 = vector.broadcast %c0_i32_18 : i32 to vector<64x1xi32>
    %38 = arith.cmpi slt, %34, %37 : vector<64x1xi32>
    %c0_i32_19 = arith.constant 0 : i32
    %39 = arith.cmpi slt, %32, %c0_i32_19 : i32
    %40 = vector.broadcast %39 : i1 to vector<64x1xi1>
    %41 = vector.broadcast %40 : vector<64x1xi1> to vector<64x1xi1>
    %42 = arith.xori %38, %41 : vector<64x1xi1>
    %43 = arith.andi %42, %36 : vector<64x1xi1>
    %44 = vector.broadcast %32 : i32 to vector<64x1xi32>
    %45 = arith.addi %34, %44 : vector<64x1xi32>
    %46 = arith.select %43, %45, %34 : vector<64x1xi1>, vector<64x1xi32>
    %47 = tpu.iota {dimensions = array<i32: 1>} : vector<64x128xi32>
    %48 = vector.broadcast %46 : vector<64x1xi32> to vector<64x128xi32>
    %49 = arith.cmpi eq, %47, %48 : vector<64x128xi32>
    %50 = arith.extui %49 : vector<64x128xi1> to vector<64x128xi32>
    %51 = arith.sitofp %50 : vector<64x128xi32> to vector<64x128xf32>
    %52 = arith.addf %4, %6 : vector<64x8xf32>
    %cst_20 = arith.constant dense<0.000000e+00> : vector<64x128xf32>
    %53 = tpu.matmul %52, %14, %cst_20 {dimension_numbers = #tpu.dot_dimension_numbers<[1], [0], [0], [1], [0, 0, 1, 1], [], []>} : vector<64x8xf32>, vector<8x128xf32>, vector<64x128xf32> -> vector<64x128xf32>
    %54 = vector.broadcast %19 : vector<64x1xf32> to vector<64x128xf32>
    %55 = arith.mulf %54, %10 : vector<64x128xf32>
    %56 = vector.broadcast %25 : vector<64x1xf32> to vector<64x128xf32>
    %57 = arith.mulf %56, %10 : vector<64x128xf32>
    %cst_21 = arith.constant 5.000000e-01 : f32
    %58 = vector.broadcast %cst_21 : f32 to vector<64x1xf32>
    %59 = arith.mulf %58, %27 : vector<64x1xf32>
    %60 = vector.broadcast %59 : vector<64x1xf32> to vector<64x128xf32>
    %61 = arith.mulf %60, %53 : vector<64x128xf32>
    %62 = tpu.concatenate %55, %57, %61 in 1 : vector<64x128xf32>, vector<64x128xf32>, vector<64x128xf32> -> vector<64x384xf32>
    %cst_22 = arith.constant dense<0.000000e+00> : vector<128x384xf32>
    %63 = tpu.matmul %51, %62, %cst_22 {dimension_numbers = #tpu.dot_dimension_numbers<[0], [0], [1], [1], [0, 1, 1, 1], [], []>} : vector<64x128xf32>, vector<64x384xf32>, vector<128x384xf32> -> vector<128x384xf32>
    %c0_23 = arith.constant 0 : index
    %c0_24 = arith.constant 0 : index
    %c0_25 = arith.constant 0 : index
    %64 = vector.load %arg8[%c0_23, %c0_24, %c0_25] : memref<1x128x128xf32, #tpu.memory_space<vmem>>, vector<1x128x128xf32>
    %65 = vector.shape_cast %64 : vector<1x128x128xf32> to vector<128x128xf32>
    %66 = vector.extract_strided_slice %63 {offsets = [0, 0], sizes = [128, 128], strides = [1, 1]} : vector<128x384xf32> to vector<128x128xf32>
    %67 = arith.addf %65, %66 : vector<128x128xf32>
    %c0_26 = arith.constant 0 : index
    %c0_27 = arith.constant 0 : index
    %c0_28 = arith.constant 0 : index
    %68 = vector.load %arg8[%c0_26, %c0_27, %c0_28] : memref<1x128x128xf32, #tpu.memory_space<vmem>>, vector<1x128x128xf32>
    %69 = vector.shape_cast %68 : vector<1x128x128xf32> to vector<128x128xf32>
    %70 = vector.shape_cast %67 : vector<128x128xf32> to vector<1x128x128xf32>
    tpu.vector_store %arg8[%c0_26, %c0_27, %c0_28], %70 {strides = array<i32>} : memref<1x128x128xf32, #tpu.memory_space<vmem>>, vector<1x128x128xf32>,
    %c0_29 = arith.constant 0 : index
    %c0_30 = arith.constant 0 : index
    %c0_31 = arith.constant 0 : index
    %71 = vector.load %arg9[%c0_29, %c0_30, %c0_31] : memref<1x128x128xf32, #tpu.memory_space<vmem>>, vector<1x128x128xf32>
    %72 = vector.shape_cast %71 : vector<1x128x128xf32> to vector<128x128xf32>
    %73 = vector.extract_strided_slice %63 {offsets = [0, 128], sizes = [128, 128], strides = [1, 1]} : vector<128x384xf32> to vector<128x128xf32>
    %74 = arith.addf %72, %73 : vector<128x128xf32>
    %c0_32 = arith.constant 0 : index
    %c0_33 = arith.constant 0 : index
    %c0_34 = arith.constant 0 : index
    %75 = vector.load %arg9[%c0_32, %c0_33, %c0_34] : memref<1x128x128xf32, #tpu.memory_space<vmem>>, vector<1x128x128xf32>
    %76 = vector.shape_cast %75 : vector<1x128x128xf32> to vector<128x128xf32>
    %77 = vector.shape_cast %74 : vector<128x128xf32> to vector<1x128x128xf32>
    tpu.vector_store %arg9[%c0_32, %c0_33, %c0_34], %77 {strides = array<i32>} : memref<1x128x128xf32, #tpu.memory_space<vmem>>, vector<1x128x128xf32>,
    %c0_35 = arith.constant 0 : index
    %c0_36 = arith.constant 0 : index
    %c0_37 = arith.constant 0 : index
    %78 = vector.load %arg10[%c0_35, %c0_36, %c0_37] : memref<1x128x128xf32, #tpu.memory_space<vmem>>, vector<1x128x128xf32>
    %79 = vector.shape_cast %78 : vector<1x128x128xf32> to vector<128x128xf32>
    %80 = vector.extract_strided_slice %63 {offsets = [0, 256], sizes = [128, 128], strides = [1, 1]} : vector<128x384xf32> to vector<128x128xf32>
    %81 = arith.addf %79, %80 : vector<128x128xf32>
    %c0_38 = arith.constant 0 : index
    %c0_39 = arith.constant 0 : index
    %c0_40 = arith.constant 0 : index
    %82 = vector.load %arg10[%c0_38, %c0_39, %c0_40] : memref<1x128x128xf32, #tpu.memory_space<vmem>>, vector<1x128x128xf32>
    %83 = vector.shape_cast %82 : vector<1x128x128xf32> to vector<128x128xf32>
    %84 = vector.shape_cast %81 : vector<128x128xf32> to vector<1x128x128xf32>
    tpu.vector_store %arg10[%c0_38, %c0_39, %c0_40], %84 {strides = array<i32>} : memref<1x128x128xf32, #tpu.memory_space<vmem>>, vector<1x128x128xf32>,
    %c0_i32_41 = arith.constant 0 : i32
    %85 = arith.cmpi eq, %arg1, %c0_i32_41 : i32
    %86 = arith.extui %85 : i1 to i32
    %c0_i32_42 = arith.constant 0 : i32
    %87 = arith.cmpi ne, %86, %c0_i32_42 : i32
    scf.if %87 {
      %c0_43 = arith.constant 0 : index
      %c0_44 = arith.constant 0 : index
      %c0_45 = arith.constant 0 : index
      %88 = vector.load %arg8[%c0_43, %c0_44, %c0_45] : memref<1x128x128xf32, #tpu.memory_space<vmem>>, vector<1x128x128xf32>
      %89 = vector.shape_cast %88 : vector<1x128x128xf32> to vector<128x128xf32>
      %90 = tpu.transpose %89, [1, 0] : vector<128x128xf32> -> vector<128x128xf32>
      %91 = arith.addf %89, %90 : vector<128x128xf32>
      %c0_46 = arith.constant 0 : index
      %c0_47 = arith.constant 0 : index
      %c0_48 = arith.constant 0 : index
      %92 = vector.load %arg8[%c0_46, %c0_47, %c0_48] : memref<1x128x128xf32, #tpu.memory_space<vmem>>, vector<1x128x128xf32>
      %93 = vector.shape_cast %92 : vector<1x128x128xf32> to vector<128x128xf32>
      %94 = vector.shape_cast %91 : vector<128x128xf32> to vector<1x128x128xf32>
      tpu.vector_store %arg8[%c0_46, %c0_47, %c0_48], %94 {strides = array<i32>} : memref<1x128x128xf32, #tpu.memory_space<vmem>>, vector<1x128x128xf32>,
      %c0_49 = arith.constant 0 : index
      %c0_50 = arith.constant 0 : index
      %c0_51 = arith.constant 0 : index
      %95 = vector.load %arg9[%c0_49, %c0_50, %c0_51] : memref<1x128x128xf32, #tpu.memory_space<vmem>>, vector<1x128x128xf32>
      %96 = vector.shape_cast %95 : vector<1x128x128xf32> to vector<128x128xf32>
      %97 = tpu.transpose %96, [1, 0] : vector<128x128xf32> -> vector<128x128xf32>
      %98 = arith.addf %96, %97 : vector<128x128xf32>
      %c0_52 = arith.constant 0 : index
      %c0_53 = arith.constant 0 : index
      %c0_54 = arith.constant 0 : index
      %99 = vector.load %arg9[%c0_52, %c0_53, %c0_54] : memref<1x128x128xf32, #tpu.memory_space<vmem>>, vector<1x128x128xf32>
      %100 = vector.shape_cast %99 : vector<1x128x128xf32> to vector<128x128xf32>
      %101 = vector.shape_cast %98 : vector<128x128xf32> to vector<1x128x128xf32>
      tpu.vector_store %arg9[%c0_52, %c0_53, %c0_54], %101 {strides = array<i32>} : memref<1x128x128xf32, #tpu.memory_space<vmem>>, vector<1x128x128xf32>,
    } else {
    }
    return
  }
  func.func @transform_0(%arg0: i32, %arg1: i32) -> (i32, i32) {
    %c0_i32 = arith.constant 0 : i32
    %c0_i32_0 = arith.constant 0 : i32
    return %arg1, %c0_i32 : i32, i32
  }
  func.func @transform_1(%arg0: i32, %arg1: i32) -> (i32, i32) {
    %c0_i32 = arith.constant 0 : i32
    %c0_i32_0 = arith.constant 0 : i32
    return %arg1, %c0_i32 : i32, i32
  }
  func.func @transform_2(%arg0: i32, %arg1: i32) -> (i32, i32) {
    %c0_i32 = arith.constant 0 : i32
    %c0_i32_0 = arith.constant 0 : i32
    return %arg1, %c0_i32 : i32, i32
  }
  func.func @transform_3(%arg0: i32, %arg1: i32) -> (i32, i32) {
    %c0_i32 = arith.constant 0 : i32
    %c0_i32_0 = arith.constant 0 : i32
    return %arg1, %c0_i32 : i32, i32
  }
  func.func @transform_4(%arg0: i32, %arg1: i32) -> (i32, i32, i32) {
    %c0_i32 = arith.constant 0 : i32
    %c0_i32_0 = arith.constant 0 : i32
    %c0_i32_1 = arith.constant 0 : i32
    return %arg0, %c0_i32, %c0_i32_0 : i32, i32, i32
  }
  func.func @transform_5(%arg0: i32, %arg1: i32) -> (i32, i32, i32) {
    %c0_i32 = arith.constant 0 : i32
    %c0_i32_0 = arith.constant 0 : i32
    %c0_i32_1 = arith.constant 0 : i32
    return %arg0, %c0_i32, %c0_i32_0 : i32, i32, i32
  }
  func.func @transform_6(%arg0: i32, %arg1: i32) -> (i32, i32, i32) {
    %c0_i32 = arith.constant 0 : i32
    %c0_i32_0 = arith.constant 0 : i32
    %c0_i32_1 = arith.constant 0 : i32
    return %arg0, %c0_i32, %c0_i32_0 : i32, i32, i32
  }
  func.func @transform_7(%arg0: i32, %arg1: i32) -> (i32, i32, i32) {
    %c0_i32 = arith.constant 0 : i32
    %c0_i32_0 = arith.constant 0 : i32
    %c0_i32_1 = arith.constant 0 : i32
    return %arg0, %c0_i32, %c0_i32_0 : i32, i32, i32
  }
  func.func @transform_8(%arg0: i32, %arg1: i32) -> (i32, i32, i32) {
    %c0_i32 = arith.constant 0 : i32
    %c0_i32_0 = arith.constant 0 : i32
    %c0_i32_1 = arith.constant 0 : i32
    return %arg0, %c0_i32, %c0_i32_0 : i32, i32, i32
  }
}

</mosaic_0001>

<llo_original>
// kernel: tpu_custom_call.1
$region0: #{tpu_custom_call.1}
  #allocation0 [shape = 'u32[]', space=smem, size = 0x4, offset = 0x4, fixed_abs, tag = 'smem constant byte address 0x4 - core index']
  #allocation1 [shape = 'u32[144,128]{1,0:T(1,128)}', space=vmem, size = 0x12000, scoped, tag = 'internal scratch']
  %s0 = inlined_call_operand.vmem [shape: bf16[64,8], index: 0, kind: input, shape index: {}]
  %s1 = inlined_call_operand.vmem [shape: bf16[64,8], index: 1, kind: input, shape index: {}]
  %s2 = inlined_call_operand.vmem [shape: bf16[64,9], index: 2, kind: input, shape index: {}]
  %s3 = inlined_call_operand.vmem [shape: bf16[64,128], index: 3, kind: input, shape index: {}]
  %s4 = inlined_call_operand.vmem [shape: f32[2,8,18], index: 4, kind: input, shape index: {}]
  %s5 = inlined_call_operand.hbm [shape: f32[2,128,128], index: 5, kind: input, shape index: {}]
  %s6 = inlined_call_operand.hbm [shape: f32[2,128,128], index: 6, kind: output, shape index: {0}]
  %s7 = inlined_call_operand.hbm [shape: f32[2,128,128], index: 7, kind: output, shape index: {1}]
  %s8 = inlined_call_operand.hbm [shape: f32[2,128,128], index: 8, kind: output, shape index: {2}]
  %9 = xla_tuple %s6, %s7, %s8
  %s10 = sld [smem:[#allocation0]]
  $region85: #{tpu_custom_call.1} parent=0
    _
  %s12 = ssub.s32 1, %s10
  %s13 = scalar_select 0, %s12, %s10
  $region1: #{tpu_custom_call.1} parent=0
    #allocation2 [shape = 'u8[131072]{0}', space=vmem, size = 0x20000, scoped, tag = 'input window, operand 5']
    #allocation3 [shape = 's32[2]{0}', space=sflag, size = 0x8, scoped, tag = 'scoped memory for tpu_custom_call.1']
    #allocation4 [shape = 's32[2]{0}', space=sflag, size = 0x8, scoped, tag = 'scoped memory for tpu_custom_call.1']
    #allocation5 [shape = 'u8[131072]{0}', space=vmem, size = 0x20000, scoped, tag = 'output window, operand 0']
    #allocation6 [shape = 'u8[131072]{0}', space=vmem, size = 0x20000, scoped, tag = 'output window, operand 1']
    #allocation7 [shape = 's32[2]{0}', space=sflag, size = 0x8, scoped, tag = 'scoped memory for tpu_custom_call.1']
    #allocation8 [shape = 'u8[131072]{0}', space=vmem, size = 0x20000, scoped, tag = 'output window, operand 2']
    %14 = vsyncpa [#allocation3], 0
    %s15 = scalar_lea.sflag [#allocation3], 1
    %16 = vsyncpa %s15, 0
    %17 = vsyncpa [#allocation4], 0
    %s18 = scalar_lea.sflag [#allocation4], 1
    %19 = vsyncpa %s18, 0
    %20 = vsyncpa [#allocation7], 0
    %s21 = scalar_lea.sflag [#allocation7], 1
    %22 = vsyncpa %s21, 0
    loop: start=0, step=1, limit=4
    $region2: #{tpu_custom_call.1} parent=1 // loop_pre_header
      _
    $region3: #{tpu_custom_call.1} parent=1 // loop_header
      %s24 = sphi 0, %s28
      %p25 = scmp.ge.s32.totalorder %s24, 4
      %s31 = sphi 0, %s43
      %s32 = sphi 0, %s39
      %s33 = sphi 0, %s31
      %s34 = sphi 0, %s32
      %s35 = sphi 0, %s33
      %s36 = sphi 0, %s34
      %s46 = sphi 0, %s48
      %s49 = sphi 0, %s46
      %s50 = sphi 0, %s49
      %s66 = sphi 0, %s50
      %s72 = sphi 0, %s74
      %s75 = sphi 0, %s72
      %s76 = sphi 0, %s75
      %s92 = sphi 0, %s76
      %s98 = sphi 0, %s100
      %s101 = sphi 0, %s98
      %s102 = sphi 0, %s101
      %s118 = sphi 0, %s102
      %s124 = sphi 0, %s126
      %s127 = sphi 0, %s124
      %s128 = sphi 0, %s127
      %s144 = sphi 0, %s128
      %s150 = sphi 0, %s152
      %s153 = sphi 0, %s150
      %s154 = sphi 0, %s153
      %s170 = sphi 0, %s154
      %s176 = sphi 0, %s178
      %s179 = sphi 0, %s176
      %s180 = sphi 0, %s179
      %s196 = sphi 0, %s180
      %s202 = sphi 0, %s204
      %s205 = sphi 0, %s202
      %s206 = sphi 0, %s205
      %s222 = sphi 0, %s206
      %s228 = sphi 0, %s230
      %s231 = sphi 0, %s228
      %s232 = sphi 0, %s231
      %s248 = sphi 0, %s232
      %s254 = sphi 0, %s256
      %s257 = sphi 0, %s254
      %s258 = sphi 0, %s257
      %s274 = sphi 0, %s258
    $region4: #{tpu_custom_call.1} parent=1 // loop_header_branch
      %27 = sbr.rel (%p25) target = $region8
    $region5: #{tpu_custom_call.1} parent=1 // loop_body
      %s29 = ssub.s32 %s24, 1
      %s30 = ssub.s32 %s24, 2
      %s37 = sadd.s32 1, %s32
      %p38 = scmp.ge.s32.totalorder %s37, 1
      %s39 = scalar_select %p38, 0, %s37
      %s40 = sadd.s32 1, %s31
      %s41 = scalar_select %p38, %s40, %s31
      %p42 = scmp.ge.s32.totalorder %s41, 2
      %s43 = scalar_select %p42, 0, %s41
      %s44 = ssub.s32 %s32, %s39
      %p45 = scmp.eq.s32.totalorder %s44, 0
      %s47 = sadd.s32 %s46, 1
      %s48 = scalar_select %p45, %s46, %s47
      %p51 = pneg %p45
      %p52 = scmp.eq.s32.totalorder %s24, 1
      %p53 = por %p51, %p52
      %p54 = scmp.ne.s32.totalorder %s46, %s49
      %p55 = scmp.eq.s32.totalorder %s24, 0
      %p56 = por %p54, %p55
      %p57 = scmp.ne.s32.totalorder %s46, %s49
      %p58 = scmp.eq.s32.totalorder %s29, 1
      %p59 = por %p57, %p58
      %p60 = scmp.ne.s32.totalorder %s49, %s50
      %p61 = scmp.eq.s32.totalorder %s29, 0
      %p62 = por %p60, %p61
      %p63 = scmp.ne.s32.totalorder %s49, %s50
      %p64 = scmp.eq.s32.totalorder %s30, 1
      %p65 = por %p63, %p64
      %p67 = scmp.ne.s32.totalorder %s50, %s66
      %p68 = scmp.eq.s32.totalorder %s30, 0
      %p69 = por %p67, %p68
      %s70 = ssub.s32 %s32, %s39
      %p71 = scmp.eq.s32.totalorder %s70, 0
      %s73 = sadd.s32 %s72, 1
      %s74 = scalar_select %p71, %s72, %s73
      %p77 = pneg %p71
      %p78 = scmp.eq.s32.totalorder %s24, 1
      %p79 = por %p77, %p78
      %p80 = scmp.ne.s32.totalorder %s72, %s75
      %p81 = scmp.eq.s32.totalorder %s24, 0
      %p82 = por %p80, %p81
      %p83 = scmp.ne.s32.totalorder %s72, %s75
      %p84 = scmp.eq.s32.totalorder %s29, 1
      %p85 = por %p83, %p84
      %p86 = scmp.ne.s32.totalorder %s75, %s76
      %p87 = scmp.eq.s32.totalorder %s29, 0
      %p88 = por %p86, %p87
      %p89 = scmp.ne.s32.totalorder %s75, %s76
      %p90 = scmp.eq.s32.totalorder %s30, 1
      %p91 = por %p89, %p90
      %p93 = scmp.ne.s32.totalorder %s76, %s92
      %p94 = scmp.eq.s32.totalorder %s30, 0
      %p95 = por %p93, %p94
      %s96 = ssub.s32 %s32, %s39
      %p97 = scmp.eq.s32.totalorder %s96, 0
      %s99 = sadd.s32 %s98, 1
      %s100 = scalar_select %p97, %s98, %s99
      %p103 = pneg %p97
      %p104 = scmp.eq.s32.totalorder %s24, 1
      %p105 = por %p103, %p104
      %p106 = scmp.ne.s32.totalorder %s98, %s101
      %p107 = scmp.eq.s32.totalorder %s24, 0
      %p108 = por %p106, %p107
      %p109 = scmp.ne.s32.totalorder %s98, %s101
      %p110 = scmp.eq.s32.totalorder %s29, 1
      %p111 = por %p109, %p110
      %p112 = scmp.ne.s32.totalorder %s101, %s102
      %p113 = scmp.eq.s32.totalorder %s29, 0
      %p114 = por %p112, %p113
      %p115 = scmp.ne.s32.totalorder %s101, %s102
      %p116 = scmp.eq.s32.totalorder %s30, 1
      %p117 = por %p115, %p116
      %p119 = scmp.ne.s32.totalorder %s102, %s118
      %p120 = scmp.eq.s32.totalorder %s30, 0
      %p121 = por %p119, %p120
      %s122 = ssub.s32 %s32, %s39
      %p123 = scmp.eq.s32.totalorder %s122, 0
      %s125 = sadd.s32 %s124, 1
      %s126 = scalar_select %p123, %s124, %s125
      %p129 = pneg %p123
      %p130 = scmp.eq.s32.totalorder %s24, 1
      %p131 = por %p129, %p130
      %p132 = scmp.ne.s32.totalorder %s124, %s127
      %p133 = scmp.eq.s32.totalorder %s24, 0
      %p134 = por %p132, %p133
      %p135 = scmp.ne.s32.totalorder %s124, %s127
      %p136 = scmp.eq.s32.totalorder %s29, 1
      %p137 = por %p135, %p136
      %p138 = scmp.ne.s32.totalorder %s127, %s128
      %p139 = scmp.eq.s32.totalorder %s29, 0
      %p140 = por %p138, %p139
      %p141 = scmp.ne.s32.totalorder %s127, %s128
      %p142 = scmp.eq.s32.totalorder %s30, 1
      %p143 = por %p141, %p142
      %p145 = scmp.ne.s32.totalorder %s128, %s144
      %p146 = scmp.eq.s32.totalorder %s30, 0
      %p147 = por %p145, %p146
      %s148 = ssub.s32 %s31, %s43
      %p149 = scmp.eq.s32.totalorder %s148, 0
      %s151 = sadd.s32 %s150, 1
      %s152 = scalar_select %p149, %s150, %s151
      %p155 = pneg %p149
      %p156 = scmp.eq.s32.totalorder %s24, 1
      %p157 = por %p155, %p156
      %p158 = scmp.ne.s32.totalorder %s150, %s153
      %p159 = scmp.eq.s32.totalorder %s24, 0
      %p160 = por %p158, %p159
      %p161 = scmp.ne.s32.totalorder %s150, %s153
      %p162 = scmp.eq.s32.totalorder %s29, 1
      %p163 = por %p161, %p162
      %p164 = scmp.ne.s32.totalorder %s153, %s154
      %p165 = scmp.eq.s32.totalorder %s29, 0
      %p166 = por %p164, %p165
      %p167 = scmp.ne.s32.totalorder %s153, %s154
      %p168 = scmp.eq.s32.totalorder %s30, 1
      %p169 = por %p167, %p168
      %p171 = scmp.ne.s32.totalorder %s154, %s170
      %p172 = scmp.eq.s32.totalorder %s30, 0
      %p173 = por %p171, %p172
      %s174 = ssub.s32 %s31, %s43
      %p175 = scmp.eq.s32.totalorder %s174, 0
      %s177 = sadd.s32 %s176, 1
      %s178 = scalar_select %p175, %s176, %s177
      %p181 = pneg %p175
      %p182 = scmp.eq.s32.totalorder %s24, 1
      %p183 = por %p181, %p182
      %p184 = scmp.ne.s32.totalorder %s176, %s179
      %p185 = scmp.eq.s32.totalorder %s24, 0
      %p186 = por %p184, %p185
      %p187 = scmp.ne.s32.totalorder %s176, %s179
      %p188 = scmp.eq.s32.totalorder %s29, 1
      %p189 = por %p187, %p188
      %p190 = scmp.ne.s32.totalorder %s179, %s180
      %p191 = scmp.eq.s32.totalorder %s29, 0
      %p192 = por %p190, %p191
      %p193 = scmp.ne.s32.totalorder %s179, %s180
      %p194 = scmp.eq.s32.totalorder %s30, 1
      %p195 = por %p193, %p194
      %p197 = scmp.ne.s32.totalorder %s180, %s196
      %p198 = scmp.eq.s32.totalorder %s30, 0
      %p199 = por %p197, %p198
      %s200 = ssub.s32 %s31, %s43
      %p201 = scmp.eq.s32.totalorder %s200, 0
      %s203 = sadd.s32 %s202, 1
      %s204 = scalar_select %p201, %s202, %s203
      %p207 = pneg %p201
      %p208 = scmp.eq.s32.totalorder %s24, 1
      %p209 = por %p207, %p208
      %p210 = scmp.ne.s32.totalorder %s202, %s205
      %p211 = scmp.eq.s32.totalorder %s24, 0
      %p212 = por %p210, %p211
      %p213 = scmp.ne.s32.totalorder %s202, %s205
      %p214 = scmp.eq.s32.totalorder %s29, 1
      %p215 = por %p213, %p214
      %p216 = scmp.ne.s32.totalorder %s205, %s206
      %p217 = scmp.eq.s32.totalorder %s29, 0
      %p218 = por %p216, %p217
      %p219 = scmp.ne.s32.totalorder %s205, %s206
      %p220 = scmp.eq.s32.totalorder %s30, 1
      %p221 = por %p219, %p220
      %p223 = scmp.ne.s32.totalorder %s206, %s222
      %p224 = scmp.eq.s32.totalorder %s30, 0
      %p225 = por %p223, %p224
      %s226 = ssub.s32 %s31, %s43
      %p227 = scmp.eq.s32.totalorder %s226, 0
      %s229 = sadd.s32 %s228, 1
      %s230 = scalar_select %p227, %s228, %s229
      %p233 = pneg %p227
      %p234 = scmp.eq.s32.totalorder %s24, 1
      %p235 = por %p233, %p234
      %p236 = scmp.ne.s32.totalorder %s228, %s231
      %p237 = scmp.eq.s32.totalorder %s24, 0
      %p238 = por %p236, %p237
      %p239 = scmp.ne.s32.totalorder %s228, %s231
      %p240 = scmp.eq.s32.totalorder %s29, 1
      %p241 = por %p239, %p240
      %p242 = scmp.ne.s32.totalorder %s231, %s232
      %p243 = scmp.eq.s32.totalorder %s29, 0
      %p244 = por %p242, %p243
      %p245 = scmp.ne.s32.totalorder %s231, %s232
      %p246 = scmp.eq.s32.totalorder %s30, 1
      %p247 = por %p245, %p246
      %p249 = scmp.ne.s32.totalorder %s232, %s248
      %p250 = scmp.eq.s32.totalorder %s30, 0
      %p251 = por %p249, %p250
      %s252 = ssub.s32 %s31, %s43
      %p253 = scmp.eq.s32.totalorder %s252, 0
      %s255 = sadd.s32 %s254, 1
      %s256 = scalar_select %p253, %s254, %s255
      %p259 = pneg %p253
      %p260 = scmp.eq.s32.totalorder %s24, 1
      %p261 = por %p259, %p260
      %p262 = scmp.ne.s32.totalorder %s254, %s257
      %p263 = scmp.eq.s32.totalorder %s24, 0
      %p264 = por %p262, %p263
      %p265 = scmp.ne.s32.totalorder %s254, %s257
      %p266 = scmp.eq.s32.totalorder %s29, 1
      %p267 = por %p265, %p266
      %p268 = scmp.ne.s32.totalorder %s257, %s258
      %p269 = scmp.eq.s32.totalorder %s29, 0
      %p270 = por %p268, %p269
      %p271 = scmp.ne.s32.totalorder %s257, %s258
      %p272 = scmp.eq.s32.totalorder %s30, 1
      %p273 = por %p271, %p272
      %p275 = scmp.ne.s32.totalorder %s258, %s274
      %p276 = scmp.eq.s32.totalorder %s30, 0
      %p277 = por %p275, %p276
      %p278 = scmp.le.s32.totalorder 1, %s24
      %p279 = scmp.lt.s32.totalorder %s24, 3
      %p280 = pnand %p278, %p279
      %p281 = pneg %p280
      // Predicated region
      $region9: #{tpu_custom_call.1} parent=5 // pred_check
        _
      $region10: #{tpu_custom_call.1} parent=5 // pred_check_branch
        %283 = sbr.rel (%p280) target = $region12
      $region11: #{tpu_custom_call.1} parent=5 // pred_region
        %s284 = ssub.s32 %s24, 1
        // Predicated region
        $region13: #{tpu_custom_call.1} parent=11 // pred_check
          %p285 = pneg %p62
        $region14: #{tpu_custom_call.1} parent=11 // pred_check_branch
          %287 = sbr.rel (%p285) target = $region16
        $region15: #{tpu_custom_call.1} parent=11 // pred_region
          %s288 = smul.u32 8, %s34
          %p289 = scmp.lt.s32.totalorder %s288, 7
          %s290 = scalar_select %p289, %s288, 7
          %s291 = smul.addr %s290, 4
          %s292 = scalar_lea.vmem %s0, %s291
          %s293 = smul.u32 8, %s34
        $region16: #{tpu_custom_call.1} parent=11 // pred_fallthru
          _
        // Predicated region
        $region17: #{tpu_custom_call.1} parent=11 // pred_check
          %p294 = pneg %p88
        $region18: #{tpu_custom_call.1} parent=11 // pred_check_branch
          %296 = sbr.rel (%p294) target = $region20
        $region19: #{tpu_custom_call.1} parent=11 // pred_region
          %s297 = smul.u32 8, %s34
          %p298 = scmp.lt.s32.totalorder %s297, 7
          %s299 = scalar_select %p298, %s297, 7
          %s300 = smul.addr %s299, 4
          %s301 = scalar_lea.vmem %s1, %s300
          %s302 = smul.u32 8, %s34
        $region20: #{tpu_custom_call.1} parent=11 // pred_fallthru
          _
        // Predicated region
        $region21: #{tpu_custom_call.1} parent=11 // pred_check
          %p303 = pneg %p114
        $region22: #{tpu_custom_call.1} parent=11 // pred_check_branch
          %305 = sbr.rel (%p303) target = $region24
        $region23: #{tpu_custom_call.1} parent=11 // pred_region
          %s306 = smul.u32 8, %s34
          %p307 = scmp.lt.s32.totalorder %s306, 7
          %s308 = scalar_select %p307, %s306, 7
          %s309 = smul.addr %s308, 4
          %s310 = scalar_lea.vmem %s2, %s309
          %s311 = smul.u32 8, %s34
        $region24: #{tpu_custom_call.1} parent=11 // pred_fallthru
          _
        // Predicated region
        $region25: #{tpu_custom_call.1} parent=11 // pred_check
          %p312 = pneg %p140
        $region26: #{tpu_custom_call.1} parent=11 // pred_check_branch
          %314 = sbr.rel (%p312) target = $region28
        $region27: #{tpu_custom_call.1} parent=11 // pred_region
          %s315 = smul.u32 8, %s34
          %p316 = scmp.lt.s32.totalorder %s315, 7
          %s317 = scalar_select %p316, %s315, 7
          %s318 = smul.addr %s317, 4
          %s319 = scalar_lea.vmem %s3, %s318
          %s320 = smul.u32 8, %s34
        $region28: #{tpu_custom_call.1} parent=11 // pred_fallthru
          _
      $region12: #{tpu_custom_call.1} parent=5 // pred_fallthru
        _
      %p321 = scmp.lt.s32.totalorder %s24, 2
      // Predicated region
      $region29: #{tpu_custom_call.1} parent=5 // pred_check
        %p322 = pneg %p321
      $region30: #{tpu_custom_call.1} parent=5 // pred_check_branch
        %324 = sbr.rel (%p322) target = $region32
      $region31: #{tpu_custom_call.1} parent=5 // pred_region
        // Predicated region
        $region33: #{tpu_custom_call.1} parent=31 // pred_check
          %p325 = pneg %p160
        $region34: #{tpu_custom_call.1} parent=31 // pred_check_branch
          %327 = sbr.rel (%p325) target = $region36
        $region35: #{tpu_custom_call.1} parent=31 // pred_region
          %p328 = scmp.lt.s32.totalorder %s31, 1
          %s329 = scalar_select %p328, %s31, 1
          %s330 = smul.addr %s329, 8
          %s331 = scalar_lea.vmem %s4, %s330
        $region36: #{tpu_custom_call.1} parent=31 // pred_fallthru
          _
        // Predicated region
        $region37: #{tpu_custom_call.1} parent=31 // pred_check
          %p332 = pneg %p186
        $region38: #{tpu_custom_call.1} parent=31 // pred_check_branch
          %334 = sbr.rel (%p332) target = $region40
        $region39: #{tpu_custom_call.1} parent=31 // pred_region
          %s335 = sand.u32 %s176, 1
          %s336 = scalar_lea.sflag [#allocation3], %s335
          %s337 = sand.u32 %s176, 1
          %s338 = smul.addr %s337, 128
          %s339 = scalar_lea.vmem [#allocation2], %s338
          %s341 = ssub.s32 2048, 2048
          %342 = vsyncadd %s336, %s341
          %s343 = smul.addr %s31, 16
          %s344 = smul.addr %s343, 128
          %s345 = scalar_lea.hbm %s5, %s344
          %s346 = sshll.u32 %s339, 4
          %s347 = int_to_ptr.vmem [resolvable:$true] %s346
          %352 = dma.hbm_to_vmem [thread:$0]  %s345, 2048, %s347, %s336, 128, 128, 8
        $region40: #{tpu_custom_call.1} parent=31 // pred_fallthru
          _
      $region32: #{tpu_custom_call.1} parent=5 // pred_fallthru
        _
      %p353 = scmp.le.s32.totalorder 1, %s24
      %p354 = scmp.lt.s32.totalorder %s24, 3
      %p355 = pnand %p353, %p354
      %p356 = pneg %p355
      // Predicated region
      $region41: #{tpu_custom_call.1} parent=5 // pred_check
        _
      $region42: #{tpu_custom_call.1} parent=5 // pred_check_branch
        %358 = sbr.rel (%p355) target = $region44
      $region43: #{tpu_custom_call.1} parent=5 // pred_region
        %s359 = ssub.s32 %s24, 1
        %s360 = sand.u32 %s179, 1
        %s361 = scalar_lea.sflag [#allocation3], %s360
        %s362 = sand.u32 %s179, 1
        %s363 = smul.addr %s362, 128
        %s364 = scalar_lea.vmem [#allocation2], %s363
        // Predicated region
        $region45: #{tpu_custom_call.1} parent=43 // pred_check
          %p365 = pneg %p192
        $region46: #{tpu_custom_call.1} parent=43 // pred_check_branch
          %367 = sbr.rel (%p365) target = $region48
        $region47: #{tpu_custom_call.1} parent=43 // pred_region
          %368 = dma.done %s361, 2048
        $region48: #{tpu_custom_call.1} parent=43 // pred_fallthru
          _
        %s369 = smul.u32 8, %s34
        %p370 = scmp.lt.s32.totalorder %s369, 7
        %s371 = scalar_select %p370, %s369, 7
        %s372 = smul.addr %s371, 4
        %s373 = scalar_lea.vmem %s0, %s372
        %p374 = pneg %p62
        %p375 = pneg %p59
        %s376 = smul.u32 8, %s34
        %p377 = scmp.lt.s32.totalorder %s376, 7
        %s378 = scalar_select %p377, %s376, 7
        %s379 = smul.addr %s378, 4
        %s380 = scalar_lea.vmem %s1, %s379
        %p381 = pneg %p88
        %p382 = pneg %p85
        %s383 = smul.u32 8, %s34
        %p384 = scmp.lt.s32.totalorder %s383, 7
        %s385 = scalar_select %p384, %s383, 7
        %s386 = smul.addr %s385, 4
        %s387 = scalar_lea.vmem %s2, %s386
        %p388 = pneg %p114
        %p389 = pneg %p111
        %s390 = smul.u32 8, %s34
        %p391 = scmp.lt.s32.totalorder %s390, 7
        %s392 = scalar_select %p391, %s390, 7
        %s393 = smul.addr %s392, 4
        %s394 = scalar_lea.vmem %s3, %s393
        %p395 = pneg %p140
        %p396 = pneg %p137
        %p397 = scmp.lt.s32.totalorder %s33, 1
        %s398 = scalar_select %p397, %s33, 1
        %s399 = smul.addr %s398, 8
        %s400 = scalar_lea.vmem %s4, %s399
        %p401 = pneg %p166
        %p402 = pneg %p163
        %s403 = sand.u32 %s179, 1
        %s404 = scalar_lea.sflag [#allocation3], %s403
        %s405 = sand.u32 %s179, 1
        %s406 = smul.addr %s405, 128
        %s407 = scalar_lea.vmem [#allocation2], %s406
        %p408 = pneg %p192
        %p409 = pneg %p189
        %p410 = pneg %p218
        %p411 = pneg %p215
        %s412 = sand.u32 %s205, 1
        %s413 = scalar_lea.sflag [#allocation4], %s412
        %s414 = sand.u32 %s205, 1
        %s415 = smul.addr %s414, 128
        %s416 = scalar_lea.vmem [#allocation5], %s415
        %p417 = pneg %p244
        %p418 = pneg %p241
        %s419 = sand.u32 %s29, 1
        %s420 = scalar_lea.sflag [#allocation7], %s419
        %s421 = sand.u32 %s231, 1
        %s422 = smul.addr %s421, 128
        %s423 = scalar_lea.vmem [#allocation6], %s422
        %p424 = pneg %p270
        %p425 = pneg %p267
        %s426 = sand.u32 %s29, 1
        %s427 = scalar_lea.sflag [#allocation7], %s426
        %s428 = sand.u32 %s257, 1
        %s429 = smul.addr %s428, 128
        %s430 = scalar_lea.vmem [#allocation8], %s429
        %s431 = smul.u32 8, %s34
        %p432 = scmp.lt.s32.totalorder %s431, 7
        %s433 = scalar_select %p432, %s431, 7
        %s434 = smul.addr %s433, 4
        %s435 = scalar_lea.vmem %s0, %s434
        %s436 = smul.u32 8, %s34
        %s437 = smul.u32 8, %s34
        %p438 = scmp.lt.s32.totalorder %s437, 7
        %s439 = scalar_select %p438, %s437, 7
        %s440 = smul.addr %s439, 4
        %s441 = scalar_lea.vmem %s1, %s440
        %s442 = smul.u32 8, %s34
        %s443 = smul.u32 8, %s34
        %p444 = scmp.lt.s32.totalorder %s443, 7
        %s445 = scalar_select %p444, %s443, 7
        %s446 = smul.addr %s445, 4
        %s447 = scalar_lea.vmem %s2, %s446
        %s448 = smul.u32 8, %s34
        %s449 = smul.u32 8, %s34
        %p450 = scmp.lt.s32.totalorder %s449, 7
        %s451 = scalar_select %p450, %s449, 7
        %s452 = smul.addr %s451, 4
        %s453 = scalar_lea.vmem %s3, %s452
        %s454 = smul.u32 8, %s34
        %p455 = scmp.lt.s32.totalorder %s33, 1
        %s456 = scalar_select %p455, %s33, 1
        %s457 = smul.addr %s456, 8
        %s458 = scalar_lea.vmem %s4, %s457
        %p459 = scmp.eq.s32.totalorder %s34, 0
        // Predicated region
        $region49: #{tpu_custom_call.1} parent=43 // pred_check
          %p460 = pneg %p459
        $region50: #{tpu_custom_call.1} parent=43 // pred_check_branch
          %462 = sbr.rel (%p460) target = $region52
        $region51: #{tpu_custom_call.1} parent=43 // pred_region
          %463 = vst [vmem:[%s416] sm:$0xff] 0.0
          %464 = vst [vmem:[%s416 + $0x8] sm:$0xff] 0.0
          %465 = vst [vmem:[%s416 + $0x10] sm:$0xff] 0.0
          %466 = vst [vmem:[%s416 + $0x18] sm:$0xff] 0.0
          %467 = vst [vmem:[%s416 + $0x20] sm:$0xff] 0.0
          %468 = vst [vmem:[%s416 + $0x28] sm:$0xff] 0.0
          %469 = vst [vmem:[%s416 + $0x30] sm:$0xff] 0.0
          %470 = vst [vmem:[%s416 + $0x38] sm:$0xff] 0.0
          %471 = vst [vmem:[%s416 + $0x40] sm:$0xff] 0.0
          %472 = vst [vmem:[%s416 + $0x48] sm:$0xff] 0.0
          %473 = vst [vmem:[%s416 + $0x50] sm:$0xff] 0.0
          %474 = vst [vmem:[%s416 + $0x58] sm:$0xff] 0.0
          %475 = vst [vmem:[%s416 + $0x60] sm:$0xff] 0.0
          %476 = vst [vmem:[%s416 + $0x68] sm:$0xff] 0.0
          %477 = vst [vmem:[%s416 + $0x70] sm:$0xff] 0.0
          %478 = vst [vmem:[%s416 + $0x78] sm:$0xff] 0.0
          %479 = vst [vmem:[%s423] sm:$0xff] 0.0
          %480 = vst [vmem:[%s423 + $0x8] sm:$0xff] 0.0
          %481 = vst [vmem:[%s423 + $0x10] sm:$0xff] 0.0
          %482 = vst [vmem:[%s423 + $0x18] sm:$0xff] 0.0
          %483 = vst [vmem:[%s423 + $0x20] sm:$0xff] 0.0
          %484 = vst [vmem:[%s423 + $0x28] sm:$0xff] 0.0
          %485 = vst [vmem:[%s423 + $0x30] sm:$0xff] 0.0
          %486 = vst [vmem:[%s423 + $0x38] sm:$0xff] 0.0
          %487 = vst [vmem:[%s423 + $0x40] sm:$0xff] 0.0
          %488 = vst [vmem:[%s423 + $0x48] sm:$0xff] 0.0
          %489 = vst [vmem:[%s423 + $0x50] sm:$0xff] 0.0
          %490 = vst [vmem:[%s423 + $0x58] sm:$0xff] 0.0
          %491 = vst [vmem:[%s423 + $0x60] sm:$0xff] 0.0
          %492 = vst [vmem:[%s423 + $0x68] sm:$0xff] 0.0
          %493 = vst [vmem:[%s423 + $0x70] sm:$0xff] 0.0
          %494 = vst [vmem:[%s423 + $0x78] sm:$0xff] 0.0
          %v495 = vld [vmem:[%s364] sm:$0xff]
          %v496 = vld [vmem:[%s364 + $0x8] sm:$0xff]
          %v497 = vld [vmem:[%s364 + $0x10] sm:$0xff]
          %v498 = vld [vmem:[%s364 + $0x18] sm:$0xff]
          %v499 = vld [vmem:[%s364 + $0x20] sm:$0xff]
          %v500 = vld [vmem:[%s364 + $0x28] sm:$0xff]
          %v501 = vld [vmem:[%s364 + $0x30] sm:$0xff]
          %v502 = vld [vmem:[%s364 + $0x38] sm:$0xff]
          %v503 = vld [vmem:[%s364 + $0x40] sm:$0xff]
          %v504 = vld [vmem:[%s364 + $0x48] sm:$0xff]
          %v505 = vld [vmem:[%s364 + $0x50] sm:$0xff]
          %v506 = vld [vmem:[%s364 + $0x58] sm:$0xff]
          %v507 = vld [vmem:[%s364 + $0x60] sm:$0xff]
          %v508 = vld [vmem:[%s364 + $0x68] sm:$0xff]
          %v509 = vld [vmem:[%s364 + $0x70] sm:$0xff]
          %v510 = vld [vmem:[%s364 + $0x78] sm:$0xff]
          %511 = vst [vmem:[%s430] sm:$0xff] %v495
          %512 = vst [vmem:[%s430 + $0x8] sm:$0xff] %v496
          %513 = vst [vmem:[%s430 + $0x10] sm:$0xff] %v497
          %514 = vst [vmem:[%s430 + $0x18] sm:$0xff] %v498
          %515 = vst [vmem:[%s430 + $0x20] sm:$0xff] %v499
          %516 = vst [vmem:[%s430 + $0x28] sm:$0xff] %v500
          %517 = vst [vmem:[%s430 + $0x30] sm:$0xff] %v501
          %518 = vst [vmem:[%s430 + $0x38] sm:$0xff] %v502
          %519 = vst [vmem:[%s430 + $0x40] sm:$0xff] %v503
          %520 = vst [vmem:[%s430 + $0x48] sm:$0xff] %v504
          %521 = vst [vmem:[%s430 + $0x50] sm:$0xff] %v505
          %522 = vst [vmem:[%s430 + $0x58] sm:$0xff] %v506
          %523 = vst [vmem:[%s430 + $0x60] sm:$0xff] %v507
          %524 = vst [vmem:[%s430 + $0x68] sm:$0xff] %v508
          %525 = vst [vmem:[%s430 + $0x70] sm:$0xff] %v509
          %526 = vst [vmem:[%s430 + $0x78] sm:$0xff] %v510
        $region52: #{tpu_custom_call.1} parent=43 // pred_fallthru
          _
        %v527 = vld [vmem:[%s435] sm:$0xf]
        %v528 = vld [vmem:[%s435 + $0x4] sm:$0xf]
        %v529 = vld [vmem:[%s435 + $0x8] sm:$0xf]
        %v530 = vld [vmem:[%s435 + $0xc] sm:$0xf]
        %v531 = vld [vmem:[%s435 + $0x10] sm:$0xf]
        %v532 = vld [vmem:[%s435 + $0x14] sm:$0xf]
        %v533 = vld [vmem:[%s435 + $0x18] sm:$0xf]
        %v534 = vld [vmem:[%s435 + $0x1c] sm:$0xf]
        %v535 = vunpack.c.l.bf16 %v527
        %v536 = vunpack.c.l.bf16 %v528
        %v537 = vunpack.c.l.bf16 %v529
        %v538 = vunpack.c.l.bf16 %v530
        %v539 = vunpack.c.l.bf16 %v531
        %v540 = vunpack.c.l.bf16 %v532
        %v541 = vunpack.c.l.bf16 %v533
        %v542 = vunpack.c.l.bf16 %v534
        %v543 = vld [vmem:[%s441] sm:$0xf]
        %v544 = vld [vmem:[%s441 + $0x4] sm:$0xf]
        %v545 = vld [vmem:[%s441 + $0x8] sm:$0xf]
        %v546 = vld [vmem:[%s441 + $0xc] sm:$0xf]
        %v547 = vld [vmem:[%s441 + $0x10] sm:$0xf]
        %v548 = vld [vmem:[%s441 + $0x14] sm:$0xf]
        %v549 = vld [vmem:[%s441 + $0x18] sm:$0xf]
        %v550 = vld [vmem:[%s441 + $0x1c] sm:$0xf]
        %v551 = vunpack.c.l.bf16 %v543
        %v552 = vunpack.c.l.bf16 %v544
        %v553 = vunpack.c.l.bf16 %v545
        %v554 = vunpack.c.l.bf16 %v546
        %v555 = vunpack.c.l.bf16 %v547
        %v556 = vunpack.c.l.bf16 %v548
        %v557 = vunpack.c.l.bf16 %v549
        %v558 = vunpack.c.l.bf16 %v550
        %v559 = vld [vmem:[%s447] sm:$0xf]
        %v560 = vld [vmem:[%s447 + $0x4] sm:$0xf]
        %v561 = vld [vmem:[%s447 + $0x8] sm:$0xf]
        %v562 = vld [vmem:[%s447 + $0xc] sm:$0xf]
        %v563 = vld [vmem:[%s447 + $0x10] sm:$0xf]
        %v564 = vld [vmem:[%s447 + $0x14] sm:$0xf]
        %v565 = vld [vmem:[%s447 + $0x18] sm:$0xf]
        %v566 = vld [vmem:[%s447 + $0x1c] sm:$0xf]
        %v567 = vunpack.c.l.bf16 %v559
        %v568 = vunpack.c.l.bf16 %v560
        %v569 = vunpack.c.l.bf16 %v561
        %v570 = vunpack.c.l.bf16 %v562
        %v571 = vunpack.c.l.bf16 %v563
        %v572 = vunpack.c.l.bf16 %v564
        %v573 = vunpack.c.l.bf16 %v565
        %v574 = vunpack.c.l.bf16 %v566
        %v575 = vld [vmem:[%s453] sm:$0xf]
        %v576 = vld [vmem:[%s453 + $0x4] sm:$0xf]
        %v577 = vld [vmem:[%s453 + $0x8] sm:$0xf]
        %v578 = vld [vmem:[%s453 + $0xc] sm:$0xf]
        %v579 = vld [vmem:[%s453 + $0x10] sm:$0xf]
        %v580 = vld [vmem:[%s453 + $0x14] sm:$0xf]
        %v581 = vld [vmem:[%s453 + $0x18] sm:$0xf]
        %v582 = vld [vmem:[%s453 + $0x1c] sm:$0xf]
        %v583 = vunpack.c.l.bf16 %v575
        %v584 = vunpack.c.l.bf16 %v576
        %v585 = vunpack.c.l.bf16 %v577
        %v586 = vunpack.c.l.bf16 %v578
        %v587 = vunpack.c.l.bf16 %v579
        %v588 = vunpack.c.l.bf16 %v580
        %v589 = vunpack.c.l.bf16 %v581
        %v590 = vunpack.c.l.bf16 %v582
        %v591 = vld [vmem:[%s458] sm:$0xff]
        %v592 = vld [vmem:[%s364] sm:$0xff]
        %vm593 = vcmask 64512
        %v595 = vsel %vm593, %v535, 0
        %v598 = vsel %vm593, %v536, 0
        %v601 = vsel %vm593, %v537, 0
        %v604 = vsel %vm593, %v538, 0
        %v607 = vsel %vm593, %v539, 0
        %v610 = vsel %vm593, %v540, 0
        %v613 = vsel %vm593, %v541, 0
        %v616 = vsel %vm593, %v542, 0
        %618 = vmatprep.subr.mxu0 0.0
        %619 = vmatpush1.msra.mxu0 %v591
        %620 = vmatprep.subr.mxu0 0.0
        %621 = vmatpush1.msra.mxu0 0.0
        %622 = vmatprep.subr.mxu0 0.0
        %623 = vmatpush1.msra.mxu0 0.0
        %624 = vmatprep.subr.mxu0 0.0
        %625 = vmatpush1.msra.mxu0 0.0
        %626 = vmatprep.subr.mxu0 0.0
        %627 = vmatpush1.msra.mxu0 0.0
        %628 = vmatprep.subr.mxu0 0.0
        %629 = vmatpush1.msra.mxu0 0.0
        %630 = vmatprep.subr.mxu0 0.0
        %631 = vmatpush1.msra.mxu0 0.0
        %632 = vmatprep.subr.mxu0 0.0
        %633 = vmatpush1.msra.mxu0 0.0
        %634 = vmatprep.subr.mxu0 0.0
        %635 = vmatpush1.msra.mxu0 0.0
        %636 = vmatprep.subr.mxu0 0.0
        %637 = vmatpush1.msra.mxu0 0.0
        %638 = vmatprep.subr.mxu0 0.0
        %639 = vmatpush1.msra.mxu0 0.0
        %640 = vmatprep.subr.mxu0 0.0
        %641 = vmatpush1.msra.mxu0 0.0
        %642 = vmatprep.subr.mxu0 0.0
        %643 = vmatpush1.msra.mxu0 0.0
        %644 = vmatprep.subr.mxu0 0.0
        %645 = vmatpush1.msra.mxu0 0.0
        %646 = vmatprep.subr.mxu0 0.0
        %647 = vmatpush1.msra.mxu0 0.0
        %648 = vmatprep.subr.mxu0 0.0
        %649 = vmatpush1.msra.mxu0 0.0
        %650 = vmatprep.subr.mxu0 0.0
        %651 = vmatpush1.msra.mxu0 0.0
        %652 = vmatprep.subr.mxu0 0.0
        %653 = vmatpush1.msra.mxu0 0.0
        %654 = vmatprep.subr.mxu0 0.0
        %655 = vmatpush1.msra.mxu0 0.0
        %656 = vmatprep.subr.mxu0 0.0
        %657 = vmatpush1.msra.mxu0 0.0
        %658 = vmatprep.subr.mxu0 0.0
        %659 = vmatpush1.msra.mxu0 0.0
        %660 = vmatprep.subr.mxu0 0.0
        %661 = vmatpush1.msra.mxu0 0.0
        %662 = vmatprep.subr.mxu0 0.0
        %663 = vmatpush1.msra.mxu0 0.0
        %664 = vmatprep.subr.mxu0 0.0
        %665 = vmatpush1.msra.mxu0 0.0
        %666 = vmatprep.subr.mxu0 0.0
        %667 = vmatpush1.msra.mxu0 0.0
        %668 = vmatprep.subr.mxu0 0.0
        %669 = vmatpush1.msra.mxu0 0.0
        %670 = vmatprep.subr.mxu0 0.0
        %671 = vmatpush1.msra.mxu0 0.0
        %672 = vmatprep.subr.mxu0 0.0
        %673 = vmatpush1.msra.mxu0 0.0
        %674 = vmatprep.subr.mxu0 0.0
        %675 = vmatpush1.msra.mxu0 0.0
        %676 = vmatprep.subr.mxu0 0.0
        %677 = vmatpush1.msra.mxu0 0.0
        %678 = vmatprep.subr.mxu0 0.0
        %679 = vmatpush1.msra.mxu0 0.0
        %680 = vmatprep.subr.mxu0 0.0
        %681 = vmatpush1.msra.mxu0 0.0
        %682 = vmatprep.mubr.f32.mxu0 0.0
        %683 = vmatmul.mubr.f32.gmra.mrb[0].mxu0 %v595
        %v684 = vpop.f32.mrb[0].mxu0
        %v685 = vadd.f32 0.0, %v684
        %v686 = vpop.f32.mrb[0].mxu0
        %687 = vmatprep.mubr.f32.mxu0 0.0
        %688 = vmatmul.mubr.f32.gmra.mrb[0].mxu0 %v598
        %v689 = vpop.f32.mrb[0].mxu0
        %v690 = vadd.f32 0.0, %v689
        %v691 = vpop.f32.mrb[0].mxu0
        %692 = vmatprep.mubr.f32.mxu0 0.0
        %693 = vmatmul.mubr.f32.gmra.mrb[0].mxu0 %v601
        %v694 = vpop.f32.mrb[0].mxu0
        %v695 = vadd.f32 0.0, %v694
        %v696 = vpop.f32.mrb[0].mxu0
        %697 = vmatprep.mubr.f32.mxu0 0.0
        %698 = vmatmul.mubr.f32.gmra.mrb[0].mxu0 %v604
        %v699 = vpop.f32.mrb[0].mxu0
        %v700 = vadd.f32 0.0, %v699
        %v701 = vpop.f32.mrb[0].mxu0
        %702 = vmatprep.mubr.f32.mxu0 0.0
        %703 = vmatmul.mubr.f32.gmra.mrb[0].mxu0 %v607
        %v704 = vpop.f32.mrb[0].mxu0
        %v705 = vadd.f32 0.0, %v704
        %v706 = vpop.f32.mrb[0].mxu0
        %707 = vmatprep.mubr.f32.mxu0 0.0
        %708 = vmatmul.mubr.f32.gmra.mrb[0].mxu0 %v610
        %v709 = vpop.f32.mrb[0].mxu0
        %v710 = vadd.f32 0.0, %v709
        %v711 = vpop.f32.mrb[0].mxu0
        %712 = vmatprep.mubr.f32.mxu0 0.0
        %713 = vmatmul.mubr.f32.gmra.mrb[0].mxu0 %v613
        %v714 = vpop.f32.mrb[0].mxu0
        %v715 = vadd.f32 0.0, %v714
        %v716 = vpop.f32.mrb[0].mxu0
        %717 = vmatprep.mubr.f32.mxu0 0.0
        %718 = vmatmul.mubr.f32.gmra.mrb[0].mxu0 %v616
        %v719 = vpop.f32.mrb[0].mxu0
        %v720 = vadd.f32 0.0, %v719
        %v721 = vpop.f32.mrb[0].mxu0
        %722 = vdwg.mxu0
        %v723 = vmul.f32 %v685, %v551
        %v724 = vmul.f32 %v690, %v552
        %v725 = vmul.f32 %v695, %v553
        %v726 = vmul.f32 %v700, %v554
        %v727 = vmul.f32 %v705, %v555
        %v728 = vmul.f32 %v710, %v556
        %v729 = vmul.f32 %v715, %v557
        %v730 = vmul.f32 %v720, %v558
        %v731 = vsel %vm593, %v723, 0.0
        %732 = vadd.xlane.f32.xlu0 %v731
        %v733 = vpop.xlane.xlu0 %732
        %v734 = vsel %vm593, %v724, 0.0
        %735 = vadd.xlane.f32.xlu0 %v734
        %v736 = vpop.xlane.xlu0 %735
        %v737 = vsel %vm593, %v725, 0.0
        %738 = vadd.xlane.f32.xlu0 %v737
        %v739 = vpop.xlane.xlu0 %738
        %v740 = vsel %vm593, %v726, 0.0
        %741 = vadd.xlane.f32.xlu0 %v740
        %v742 = vpop.xlane.xlu0 %741
        %v743 = vsel %vm593, %v727, 0.0
        %744 = vadd.xlane.f32.xlu0 %v743
        %v745 = vpop.xlane.xlu0 %744
        %v746 = vsel %vm593, %v728, 0.0
        %747 = vadd.xlane.f32.xlu0 %v746
        %v748 = vpop.xlane.xlu0 %747
        %v749 = vsel %vm593, %v729, 0.0
        %750 = vadd.xlane.f32.xlu0 %v749
        %v751 = vpop.xlane.xlu0 %750
        %v752 = vsel %vm593, %v730, 0.0
        %753 = vadd.xlane.f32.xlu0 %v752
        %v754 = vpop.xlane.xlu0 %753
        %763 = vrot.lane.b32.xlu0 %v567, 8
        %v764 = vpop.permute.xlu0 %763
        %765 = vrot.lane.b32.xlu0 %v568, 8
        %v766 = vpop.permute.xlu0 %765
        %767 = vrot.lane.b32.xlu0 %v569, 8
        %v768 = vpop.permute.xlu0 %767
        %769 = vrot.lane.b32.xlu0 %v570, 8
        %v770 = vpop.permute.xlu0 %769
        %771 = vrot.lane.b32.xlu0 %v571, 8
        %v772 = vpop.permute.xlu0 %771
        %773 = vrot.lane.b32.xlu0 %v572, 8
        %v774 = vpop.permute.xlu0 %773
        %775 = vrot.lane.b32.xlu0 %v573, 8
        %v776 = vpop.permute.xlu0 %775
        %777 = vrot.lane.b32.xlu0 %v574, 8
        %v778 = vpop.permute.xlu0 %777
        %v787 = vmul.f32 %v685, %v764
        %v788 = vmul.f32 %v690, %v766
        %v789 = vmul.f32 %v695, %v768
        %v790 = vmul.f32 %v700, %v770
        %v791 = vmul.f32 %v705, %v772
        %v792 = vmul.f32 %v710, %v774
        %v793 = vmul.f32 %v715, %v776
        %v794 = vmul.f32 %v720, %v778
        %803 = vrot.lane.b32.xlu0 %v787, 120
        %v804 = vpop.permute.xlu0 %803
        %805 = vrot.lane.b32.xlu0 %v788, 120
        %v806 = vpop.permute.xlu0 %805
        %807 = vrot.lane.b32.xlu0 %v789, 120
        %v808 = vpop.permute.xlu0 %807
        %809 = vrot.lane.b32.xlu0 %v790, 120
        %v810 = vpop.permute.xlu0 %809
        %811 = vrot.lane.b32.xlu0 %v791, 120
        %v812 = vpop.permute.xlu0 %811
        %813 = vrot.lane.b32.xlu0 %v792, 120
        %v814 = vpop.permute.xlu0 %813
        %815 = vrot.lane.b32.xlu0 %v793, 120
        %v816 = vpop.permute.xlu0 %815
        %817 = vrot.lane.b32.xlu0 %v794, 120
        %v818 = vpop.permute.xlu0 %817
        %vm827 = vcmask 72704
        %v828 = vsel %vm827, %v804, 0.0
        %829 = vadd.xlane.f32.xlu0 %v828
        %v830 = vpop.xlane.xlu0 %829
        %v831 = vsel %vm827, %v806, 0.0
        %832 = vadd.xlane.f32.xlu0 %v831
        %v833 = vpop.xlane.xlu0 %832
        %v834 = vsel %vm827, %v808, 0.0
        %835 = vadd.xlane.f32.xlu0 %v834
        %v836 = vpop.xlane.xlu0 %835
        %v837 = vsel %vm827, %v810, 0.0
        %838 = vadd.xlane.f32.xlu0 %v837
        %v839 = vpop.xlane.xlu0 %838
        %v840 = vsel %vm827, %v812, 0.0
        %841 = vadd.xlane.f32.xlu0 %v840
        %v842 = vpop.xlane.xlu0 %841
        %v843 = vsel %vm827, %v814, 0.0
        %844 = vadd.xlane.f32.xlu0 %v843
        %v845 = vpop.xlane.xlu0 %844
        %v846 = vsel %vm827, %v816, 0.0
        %847 = vadd.xlane.f32.xlu0 %v846
        %v848 = vpop.xlane.xlu0 %847
        %v849 = vsel %vm827, %v818, 0.0
        %850 = vadd.xlane.f32.xlu0 %v849
        %v851 = vpop.xlane.xlu0 %850
        %v852 = vmul.f32 %v685, %v733
        %v853 = vmul.f32 %v690, %v736
        %v854 = vmul.f32 %v695, %v739
        %v855 = vmul.f32 %v700, %v742
        %v856 = vmul.f32 %v705, %v745
        %v857 = vmul.f32 %v710, %v748
        %v858 = vmul.f32 %v715, %v751
        %v859 = vmul.f32 %v720, %v754
        %v860 = vcvt.f32.s32.to.zero.pseudo %v733
        %v861 = vcvt.f32.s32.to.zero.pseudo %v736
        %v862 = vcvt.f32.s32.to.zero.pseudo %v739
        %v863 = vcvt.f32.s32.to.zero.pseudo %v742
        %v864 = vcvt.f32.s32.to.zero.pseudo %v745
        %v865 = vcvt.f32.s32.to.zero.pseudo %v748
        %v866 = vcvt.f32.s32.to.zero.pseudo %v751
        %v867 = vcvt.f32.s32.to.zero.pseudo %v754
        %v868 = vcvt.s32.f32 %v860
        %v869 = vcvt.s32.f32 %v861
        %v870 = vcvt.s32.f32 %v862
        %v871 = vcvt.s32.f32 %v863
        %v872 = vcvt.s32.f32 %v864
        %v873 = vcvt.s32.f32 %v865
        %v874 = vcvt.s32.f32 %v866
        %v875 = vcvt.s32.f32 %v867
        %v876 = vcvt.f32.s32.to.zero.pseudo %v830
        %v877 = vcvt.f32.s32.to.zero.pseudo %v833
        %v878 = vcvt.f32.s32.to.zero.pseudo %v836
        %v879 = vcvt.f32.s32.to.zero.pseudo %v839
        %v880 = vcvt.f32.s32.to.zero.pseudo %v842
        %v881 = vcvt.f32.s32.to.zero.pseudo %v845
        %v882 = vcvt.f32.s32.to.zero.pseudo %v848
        %v883 = vcvt.f32.s32.to.zero.pseudo %v851
        %v884 = vadd.s32 %v876, 8
        %v885 = vadd.s32 %v877, 8
        %v886 = vadd.s32 %v878, 8
        %v887 = vadd.s32 %v879, 8
        %v888 = vadd.s32 %v880, 8
        %v889 = vadd.s32 %v881, 8
        %v890 = vadd.s32 %v882, 8
        %v891 = vadd.s32 %v883, 8
        %vm892 = vcmp.lt.s32.totalorder %v884, 0
        %v893 = vsub.s32 0, %v884
        %v894 = vsel %vm892, %v893, %v884
        %v895 = vshrl.u32 %v894, 4
        %v896 = vand.u32 %v894, 15
        %v897 = vsub.s32 0, %v896
        %v898 = vsel %vm892, %v897, %v896
        %vm899 = vcmp.lt.s32.totalorder %v885, 0
        %v900 = vsub.s32 0, %v885
        %v901 = vsel %vm899, %v900, %v885
        %v902 = vshrl.u32 %v901, 4
        %v903 = vand.u32 %v901, 15
        %v904 = vsub.s32 0, %v903
        %v905 = vsel %vm899, %v904, %v903
        %vm906 = vcmp.lt.s32.totalorder %v886, 0
        %v907 = vsub.s32 0, %v886
        %v908 = vsel %vm906, %v907, %v886
        %v909 = vshrl.u32 %v908, 4
        %v910 = vand.u32 %v908, 15
        %v911 = vsub.s32 0, %v910
        %v912 = vsel %vm906, %v911, %v910
        %vm913 = vcmp.lt.s32.totalorder %v887, 0
        %v914 = vsub.s32 0, %v887
        %v915 = vsel %vm913, %v914, %v887
        %v916 = vshrl.u32 %v915, 4
        %v917 = vand.u32 %v915, 15
        %v918 = vsub.s32 0, %v917
        %v919 = vsel %vm913, %v918, %v917
        %vm920 = vcmp.lt.s32.totalorder %v888, 0
        %v921 = vsub.s32 0, %v888
        %v922 = vsel %vm920, %v921, %v888
        %v923 = vshrl.u32 %v922, 4
        %v924 = vand.u32 %v922, 15
        %v925 = vsub.s32 0, %v924
        %v926 = vsel %vm920, %v925, %v924
        %vm927 = vcmp.lt.s32.totalorder %v889, 0
        %v928 = vsub.s32 0, %v889
        %v929 = vsel %vm927, %v928, %v889
        %v930 = vshrl.u32 %v929, 4
        %v931 = vand.u32 %v929, 15
        %v932 = vsub.s32 0, %v931
        %v933 = vsel %vm927, %v932, %v931
        %vm934 = vcmp.lt.s32.totalorder %v890, 0
        %v935 = vsub.s32 0, %v890
        %v936 = vsel %vm934, %v935, %v890
        %v937 = vshrl.u32 %v936, 4
        %v938 = vand.u32 %v936, 15
        %v939 = vsub.s32 0, %v938
        %v940 = vsel %vm934, %v939, %v938
        %vm941 = vcmp.lt.s32.totalorder %v891, 0
        %v942 = vsub.s32 0, %v891
        %v943 = vsel %vm941, %v942, %v891
        %v944 = vshrl.u32 %v943, 4
        %v945 = vand.u32 %v943, 15
        %v946 = vsub.s32 0, %v945
        %v947 = vsel %vm941, %v946, %v945
        %vm948 = vcmp.ne.s32.totalorder %v898, 0
        %vm949 = vcmp.ne.s32.totalorder %v905, 0
        %vm950 = vcmp.ne.s32.totalorder %v912, 0
        %vm951 = vcmp.ne.s32.totalorder %v919, 0
        %vm952 = vcmp.ne.s32.totalorder %v926, 0
        %vm953 = vcmp.ne.s32.totalorder %v933, 0
        %vm954 = vcmp.ne.s32.totalorder %v940, 0
        %vm955 = vcmp.ne.s32.totalorder %v947, 0
        %vm956 = vcmp.lt.s32.totalorder %v898, 0
        %vm957 = vcmp.lt.s32.totalorder %v905, 0
        %vm958 = vcmp.lt.s32.totalorder %v912, 0
        %vm959 = vcmp.lt.s32.totalorder %v919, 0
        %vm960 = vcmp.lt.s32.totalorder %v926, 0
        %vm961 = vcmp.lt.s32.totalorder %v933, 0
        %vm962 = vcmp.lt.s32.totalorder %v940, 0
        %vm963 = vcmp.lt.s32.totalorder %v947, 0
        %vm964 = vmand %vm956, %vm948
        %vm965 = vmand %vm957, %vm949
        %vm966 = vmand %vm958, %vm950
        %vm967 = vmand %vm959, %vm951
        %vm968 = vmand %vm960, %vm952
        %vm969 = vmand %vm961, %vm953
        %vm970 = vmand %vm962, %vm954
        %vm971 = vmand %vm963, %vm955
        %v972 = vadd.s32 %v898, 16
        %v973 = vadd.s32 %v905, 16
        %v974 = vadd.s32 %v912, 16
        %v975 = vadd.s32 %v919, 16
        %v976 = vadd.s32 %v926, 16
        %v977 = vadd.s32 %v933, 16
        %v978 = vadd.s32 %v940, 16
        %v979 = vadd.s32 %v947, 16
        %v980 = vsel %vm964, %v972, %v898
        %v981 = vsel %vm965, %v973, %v905
        %v982 = vsel %vm966, %v974, %v912
        %v983 = vsel %vm967, %v975, %v919
        %v984 = vsel %vm968, %v976, %v926
        %v985 = vsel %vm969, %v977, %v933
        %v986 = vsel %vm970, %v978, %v940
        %v987 = vsel %vm971, %v979, %v947
        %v988 = vlaneseq
        %v989 = vand.u32 %v988, 127
        %vm990 = vcmp.eq.s32.totalorder %v989, %v980
        %vm991 = vcmp.eq.s32.totalorder %v989, %v981
        %vm992 = vcmp.eq.s32.totalorder %v989, %v982
        %vm993 = vcmp.eq.s32.totalorder %v989, %v983
        %vm994 = vcmp.eq.s32.totalorder %v989, %v984
        %vm995 = vcmp.eq.s32.totalorder %v989, %v985
        %vm996 = vcmp.eq.s32.totalorder %v989, %v986
        %vm997 = vcmp.eq.s32.totalorder %v989, %v987
        %v998 = vsel %vm990, 1, 0
        %v999 = vsel %vm991, 1, 0
        %v1000 = vsel %vm992, 1, 0
        %v1001 = vsel %vm993, 1, 0
        %v1002 = vsel %vm994, 1, 0
        %v1003 = vsel %vm995, 1, 0
        %v1004 = vsel %vm996, 1, 0
        %v1005 = vsel %vm997, 1, 0
        %v1006 = vcvt.s32.f32 %v998
        %v1007 = vcvt.s32.f32 %v999
        %v1008 = vcvt.s32.f32 %v1000
        %v1009 = vcvt.s32.f32 %v1001
        %v1010 = vcvt.s32.f32 %v1002
        %v1011 = vcvt.s32.f32 %v1003
        %v1012 = vcvt.s32.f32 %v1004
        %v1013 = vcvt.s32.f32 %v1005
        %v1014 = vadd.f32 %v535, %v551
        %v1015 = vadd.f32 %v536, %v552
        %v1016 = vadd.f32 %v537, %v553
        %v1017 = vadd.f32 %v538, %v554
        %v1018 = vadd.f32 %v539, %v555
        %v1019 = vadd.f32 %v540, %v556
        %v1020 = vadd.f32 %v541, %v557
        %v1021 = vadd.f32 %v542, %v558
        %v1023 = vsel %vm593, %v1014, 0
        %v1026 = vsel %vm593, %v1015, 0
        %v1029 = vsel %vm593, %v1016, 0
        %v1032 = vsel %vm593, %v1017, 0
        %v1035 = vsel %vm593, %v1018, 0
        %v1038 = vsel %vm593, %v1019, 0
        %v1041 = vsel %vm593, %v1020, 0
        %v1044 = vsel %vm593, %v1021, 0
        %1046 = vmatprep.subr.mxu0 0.0
        %1047 = vmatpush1.msra.mxu0 %v592
        %1048 = vmatprep.subr.mxu0 0.0
        %1049 = vmatpush1.msra.mxu0 0.0
        %1050 = vmatprep.subr.mxu0 0.0
        %1051 = vmatpush1.msra.mxu0 0.0
        %1052 = vmatprep.subr.mxu0 0.0
        %1053 = vmatpush1.msra.mxu0 0.0
        %1054 = vmatprep.subr.mxu0 0.0
        %1055 = vmatpush1.msra.mxu0 0.0
        %1056 = vmatprep.subr.mxu0 0.0
        %1057 = vmatpush1.msra.mxu0 0.0
        %1058 = vmatprep.subr.mxu0 0.0
        %1059 = vmatpush1.msra.mxu0 0.0
        %1060 = vmatprep.subr.mxu0 0.0
        %1061 = vmatpush1.msra.mxu0 0.0
        %1062 = vmatprep.subr.mxu0 0.0
        %1063 = vmatpush1.msra.mxu0 0.0
        %1064 = vmatprep.subr.mxu0 0.0
        %1065 = vmatpush1.msra.mxu0 0.0
        %1066 = vmatprep.subr.mxu0 0.0
        %1067 = vmatpush1.msra.mxu0 0.0
        %1068 = vmatprep.subr.mxu0 0.0
        %1069 = vmatpush1.msra.mxu0 0.0
        %1070 = vmatprep.subr.mxu0 0.0
        %1071 = vmatpush1.msra.mxu0 0.0
        %1072 = vmatprep.subr.mxu0 0.0
        %1073 = vmatpush1.msra.mxu0 0.0
        %1074 = vmatprep.subr.mxu0 0.0
        %1075 = vmatpush1.msra.mxu0 0.0
        %1076 = vmatprep.subr.mxu0 0.0
        %1077 = vmatpush1.msra.mxu0 0.0
        %1078 = vmatprep.subr.mxu0 0.0
        %1079 = vmatpush1.msra.mxu0 0.0
        %1080 = vmatprep.subr.mxu0 0.0
        %1081 = vmatpush1.msra.mxu0 0.0
        %1082 = vmatprep.subr.mxu0 0.0
        %1083 = vmatpush1.msra.mxu0 0.0
        %1084 = vmatprep.subr.mxu0 0.0
        %1085 = vmatpush1.msra.mxu0 0.0
        %1086 = vmatprep.subr.mxu0 0.0
        %1087 = vmatpush1.msra.mxu0 0.0
        %1088 = vmatprep.subr.mxu0 0.0
        %1089 = vmatpush1.msra.mxu0 0.0
        %1090 = vmatprep.subr.mxu0 0.0
        %1091 = vmatpush1.msra.mxu0 0.0
        %1092 = vmatprep.subr.mxu0 0.0
        %1093 = vmatpush1.msra.mxu0 0.0
        %1094 = vmatprep.subr.mxu0 0.0
        %1095 = vmatpush1.msra.mxu0 0.0
        %1096 = vmatprep.subr.mxu0 0.0
        %1097 = vmatpush1.msra.mxu0 0.0
        %1098 = vmatprep.subr.mxu0 0.0
        %1099 = vmatpush1.msra.mxu0 0.0
        %1100 = vmatprep.subr.mxu0 0.0
        %1101 = vmatpush1.msra.mxu0 0.0
        %1102 = vmatprep.subr.mxu0 0.0
        %1103 = vmatpush1.msra.mxu0 0.0
        %1104 = vmatprep.subr.mxu0 0.0
        %1105 = vmatpush1.msra.mxu0 0.0
        %1106 = vmatprep.subr.mxu0 0.0
        %1107 = vmatpush1.msra.mxu0 0.0
        %1108 = vmatprep.subr.mxu0 0.0
        %1109 = vmatpush1.msra.mxu0 0.0
        %1110 = vmatprep.mubr.f32.mxu0 0.0
        %1111 = vmatmul.mubr.f32.gmra.mrb[0].mxu0 %v1023
        %v1112 = vpop.f32.mrb[0].mxu0
        %v1113 = vadd.f32 0.0, %v1112
        %v1114 = vpop.f32.mrb[0].mxu0
        %1115 = vmatprep.mubr.f32.mxu0 0.0
        %1116 = vmatmul.mubr.f32.gmra.mrb[0].mxu0 %v1026
        %v1117 = vpop.f32.mrb[0].mxu0
        %v1118 = vadd.f32 0.0, %v1117
        %v1119 = vpop.f32.mrb[0].mxu0
        %1120 = vmatprep.mubr.f32.mxu0 0.0
        %1121 = vmatmul.mubr.f32.gmra.mrb[0].mxu0 %v1029
        %v1122 = vpop.f32.mrb[0].mxu0
        %v1123 = vadd.f32 0.0, %v1122
        %v1124 = vpop.f32.mrb[0].mxu0
        %1125 = vmatprep.mubr.f32.mxu0 0.0
        %1126 = vmatmul.mubr.f32.gmra.mrb[0].mxu0 %v1032
        %v1127 = vpop.f32.mrb[0].mxu0
        %v1128 = vadd.f32 0.0, %v1127
        %v1129 = vpop.f32.mrb[0].mxu0
        %1130 = vmatprep.mubr.f32.mxu0 0.0
        %1131 = vmatmul.mubr.f32.gmra.mrb[0].mxu0 %v1035
        %v1132 = vpop.f32.mrb[0].mxu0
        %v1133 = vadd.f32 0.0, %v1132
        %v1134 = vpop.f32.mrb[0].mxu0
        %1135 = vmatprep.mubr.f32.mxu0 0.0
        %1136 = vmatmul.mubr.f32.gmra.mrb[0].mxu0 %v1038
        %v1137 = vpop.f32.mrb[0].mxu0
        %v1138 = vadd.f32 0.0, %v1137
        %v1139 = vpop.f32.mrb[0].mxu0
        %1140 = vmatprep.mubr.f32.mxu0 0.0
        %1141 = vmatmul.mubr.f32.gmra.mrb[0].mxu0 %v1041
        %v1142 = vpop.f32.mrb[0].mxu0
        %v1143 = vadd.f32 0.0, %v1142
        %v1144 = vpop.f32.mrb[0].mxu0
        %1145 = vmatprep.mubr.f32.mxu0 0.0
        %1146 = vmatmul.mubr.f32.gmra.mrb[0].mxu0 %v1044
        %v1147 = vpop.f32.mrb[0].mxu0
        %v1148 = vadd.f32 0.0, %v1147
        %v1149 = vpop.f32.mrb[0].mxu0
        %1150 = vdwg.mxu0
        %v1151 = vmul.f32 %v733, %v583
        %v1152 = vmul.f32 %v736, %v584
        %v1153 = vmul.f32 %v739, %v585
        %v1154 = vmul.f32 %v742, %v586
        %v1155 = vmul.f32 %v745, %v587
        %v1156 = vmul.f32 %v748, %v588
        %v1157 = vmul.f32 %v751, %v589
        %v1158 = vmul.f32 %v754, %v590
        %1160 = vset.pattern.permute.xlu0 17
        %1161 = vperm.xlu0 %1160, %v852
        %v1162 = vpop.permute.xlu0 %1161
        %1165 = vset.pattern.permute.xlu0 17
        %1166 = vperm.xlu0 %1165, %v853
        %v1167 = vpop.permute.xlu0 %1166
        %1170 = vset.pattern.permute.xlu0 17
        %1171 = vperm.xlu0 %1170, %v854
        %v1172 = vpop.permute.xlu0 %1171
        %1175 = vset.pattern.permute.xlu0 17
        %1176 = vperm.xlu0 %1175, %v855
        %v1177 = vpop.permute.xlu0 %1176
        %1180 = vset.pattern.permute.xlu0 17
        %1181 = vperm.xlu0 %1180, %v856
        %v1182 = vpop.permute.xlu0 %1181
        %1185 = vset.pattern.permute.xlu0 17
        %1186 = vperm.xlu0 %1185, %v857
        %v1187 = vpop.permute.xlu0 %1186
        %1190 = vset.pattern.permute.xlu0 17
        %1191 = vperm.xlu0 %1190, %v858
        %v1192 = vpop.permute.xlu0 %1191
        %1195 = vset.pattern.permute.xlu0 17
        %1196 = vperm.xlu0 %1195, %v859
        %v1197 = vpop.permute.xlu0 %1196
        %v1199 = vmul.f32 %v1162, %v583
        %v1200 = vmul.f32 %v1167, %v584
        %v1201 = vmul.f32 %v1172, %v585
        %v1202 = vmul.f32 %v1177, %v586
        %v1203 = vmul.f32 %v1182, %v587
        %v1204 = vmul.f32 %v1187, %v588
        %v1205 = vmul.f32 %v1192, %v589
        %v1206 = vmul.f32 %v1197, %v590
        %v1207 = vmul.f32 %v868, 0.5
        %v1208 = vmul.f32 %v869, 0.5
        %v1209 = vmul.f32 %v870, 0.5
        %v1210 = vmul.f32 %v871, 0.5
        %v1211 = vmul.f32 %v872, 0.5
        %v1212 = vmul.f32 %v873, 0.5
        %v1213 = vmul.f32 %v874, 0.5
        %v1214 = vmul.f32 %v875, 0.5
        %v1215 = vmul.f32 %v1207, %v1113
        %v1216 = vmul.f32 %v1208, %v1118
        %v1217 = vmul.f32 %v1209, %v1123
        %v1218 = vmul.f32 %v1210, %v1128
        %v1219 = vmul.f32 %v1211, %v1133
        %v1220 = vmul.f32 %v1212, %v1138
        %v1221 = vmul.f32 %v1213, %v1143
        %v1222 = vmul.f32 %v1214, %v1148
        %1223 = vxpose.xlu0.b32.start [1/16] %v1006, 128
        %1224 = vxpose.xlu0.b32.cont [2/16] %v1007, 128
        %1225 = vxpose.xlu0.b32.cont [3/16] %v1008, 128
        %1226 = vxpose.xlu0.b32.cont [4/16] %v1009, 128
        %1227 = vxpose.xlu0.b32.cont [5/16] %v1010, 128
        %1228 = vxpose.xlu0.b32.cont [6/16] %v1011, 128
        %1229 = vxpose.xlu0.b32.cont [7/16] %v1012, 128
        %1230 = vxpose.xlu0.b32.cont [8/16] %v1013, 128
        %1231 = vxpose.xlu0.b32.cont [9/16] 0.0, 128
        %1232 = vxpose.xlu0.b32.cont [10/16] 0.0, 128
        %1233 = vxpose.xlu0.b32.cont [11/16] 0.0, 128
        %1234 = vxpose.xlu0.b32.cont [12/16] 0.0, 128
        %1235 = vxpose.xlu0.b32.cont [13/16] 0.0, 128
        %1236 = vxpose.xlu0.b32.cont [14/16] 0.0, 128
        %1237 = vxpose.xlu0.b32.cont [15/16] 0.0, 128
        %1238 = vxpose.xlu0.b32.end [16/16] 0.0, 128
        %v1239 = vpop.trf.xlu0
        %v1240 = vpop.trf.xlu0
        %v1241 = vpop.trf.xlu0
        %v1242 = vpop.trf.xlu0
        %v1243 = vpop.trf.xlu0
        %v1244 = vpop.trf.xlu0
        %v1245 = vpop.trf.xlu0
        %v1246 = vpop.trf.xlu0
        %v1247 = vpop.trf.xlu0
        %v1248 = vpop.trf.xlu0
        %v1249 = vpop.trf.xlu0
        %v1250 = vpop.trf.xlu0
        %v1251 = vpop.trf.xlu0
        %v1252 = vpop.trf.xlu0
        %v1253 = vpop.trf.xlu0
        %v1254 = vpop.trf.xlu0
        %vm1255 = vcmask 523264
        %v1257 = vsel %vm1255, %v1239, 0
        %v1260 = vsel %vm1255, %v1240, 0
        %v1263 = vsel %vm1255, %v1241, 0
        %v1266 = vsel %vm1255, %v1242, 0
        %v1269 = vsel %vm1255, %v1243, 0
        %v1272 = vsel %vm1255, %v1244, 0
        %v1275 = vsel %vm1255, %v1245, 0
        %v1278 = vsel %vm1255, %v1246, 0
        %v1281 = vsel %vm1255, %v1247, 0
        %v1284 = vsel %vm1255, %v1248, 0
        %v1287 = vsel %vm1255, %v1249, 0
        %v1290 = vsel %vm1255, %v1250, 0
        %v1293 = vsel %vm1255, %v1251, 0
        %v1296 = vsel %vm1255, %v1252, 0
        %v1299 = vsel %vm1255, %v1253, 0
        %v1302 = vsel %vm1255, %v1254, 0
        %1304 = vmatprep.subr.mxu0 %v1199
        %1305 = vmatpush1.msra.mxu0 %v1151
        %1306 = vmatprep.subr.mxu0 %v1200
        %1307 = vmatpush1.msra.mxu0 %v1152
        %1308 = vmatprep.subr.mxu0 %v1201
        %1309 = vmatpush1.msra.mxu0 %v1153
        %1310 = vmatprep.subr.mxu0 %v1202
        %1311 = vmatpush1.msra.mxu0 %v1154
        %1312 = vmatprep.subr.mxu0 %v1203
        %1313 = vmatpush1.msra.mxu0 %v1155
        %1314 = vmatprep.subr.mxu0 %v1204
        %1315 = vmatpush1.msra.mxu0 %v1156
        %1316 = vmatprep.subr.mxu0 %v1205
        %1317 = vmatpush1.msra.mxu0 %v1157
        %1318 = vmatprep.subr.mxu0 %v1206
        %1319 = vmatpush1.msra.mxu0 %v1158
        %1320 = vmatprep.subr.mxu0 0.0
        %1321 = vmatpush1.msra.mxu0 0.0
        %1322 = vmatprep.subr.mxu0 0.0
        %1323 = vmatpush1.msra.mxu0 0.0
        %1324 = vmatprep.subr.mxu0 0.0
        %1325 = vmatpush1.msra.mxu0 0.0
        %1326 = vmatprep.subr.mxu0 0.0
        %1327 = vmatpush1.msra.mxu0 0.0
        %1328 = vmatprep.subr.mxu0 0.0
        %1329 = vmatpush1.msra.mxu0 0.0
        %1330 = vmatprep.subr.mxu0 0.0
        %1331 = vmatpush1.msra.mxu0 0.0
        %1332 = vmatprep.subr.mxu0 0.0
        %1333 = vmatpush1.msra.mxu0 0.0
        %1334 = vmatprep.subr.mxu0 0.0
        %1335 = vmatpush1.msra.mxu0 0.0
        %1336 = vmatprep.subr.mxu0 0.0
        %1337 = vmatpush1.msra.mxu0 0.0
        %1338 = vmatprep.subr.mxu0 0.0
        %1339 = vmatpush1.msra.mxu0 0.0
        %1340 = vmatprep.subr.mxu0 0.0
        %1341 = vmatpush1.msra.mxu0 0.0
        %1342 = vmatprep.subr.mxu0 0.0
        %1343 = vmatpush1.msra.mxu0 0.0
        %1344 = vmatprep.subr.mxu0 0.0
        %1345 = vmatpush1.msra.mxu0 0.0
        %1346 = vmatprep.subr.mxu0 0.0
        %1347 = vmatpush1.msra.mxu0 0.0
        %1348 = vmatprep.subr.mxu0 0.0
        %1349 = vmatpush1.msra.mxu0 0.0
        %1350 = vmatprep.subr.mxu0 0.0
        %1351 = vmatpush1.msra.mxu0 0.0
        %1352 = vmatprep.subr.mxu0 0.0
        %1353 = vmatpush1.msra.mxu0 0.0
        %1354 = vmatprep.subr.mxu0 0.0
        %1355 = vmatpush1.msra.mxu0 0.0
        %1356 = vmatprep.subr.mxu0 0.0
        %1357 = vmatpush1.msra.mxu0 0.0
        %1358 = vmatprep.subr.mxu0 0.0
        %1359 = vmatpush1.msra.mxu0 0.0
        %1360 = vmatprep.subr.mxu0 0.0
        %1361 = vmatpush1.msra.mxu0 0.0
        %1362 = vmatprep.subr.mxu0 0.0
        %1363 = vmatpush1.msra.mxu0 0.0
        %1364 = vmatprep.subr.mxu0 0.0
        %1365 = vmatpush1.msra.mxu0 0.0
        %1366 = vmatprep.subr.mxu0 0.0
        %1367 = vmatpush1.msra.mxu0 0.0
        %1368 = vmatprep.mubr.f32.mxu0 0.0
        %1369 = vmatmul.mubr.f32.gmra.mrb[0].mxu0 %v1257
        %v1370 = vpop.f32.mrb[0].mxu0
        %v1371 = vadd.f32 0.0, %v1370
        %v1372 = vpop.f32.mrb[0].mxu0
        %v1373 = vadd.f32 0.0, %v1372
        %1374 = vmatprep.mubr.f32.mxu0 0.0
        %1375 = vmatmul.mubr.f32.gmra.mrb[0].mxu0 %v1260
        %v1376 = vpop.f32.mrb[0].mxu0
        %v1377 = vadd.f32 0.0, %v1376
        %v1378 = vpop.f32.mrb[0].mxu0
        %v1379 = vadd.f32 0.0, %v1378
        %1380 = vmatprep.mubr.f32.mxu0 0.0
        %1381 = vmatmul.mubr.f32.gmra.mrb[0].mxu0 %v1263
        %v1382 = vpop.f32.mrb[0].mxu0
        %v1383 = vadd.f32 0.0, %v1382
        %v1384 = vpop.f32.mrb[0].mxu0
        %v1385 = vadd.f32 0.0, %v1384
        %1386 = vmatprep.mubr.f32.mxu0 0.0
        %1387 = vmatmul.mubr.f32.gmra.mrb[0].mxu0 %v1266
        %v1388 = vpop.f32.mrb[0].mxu0
        %v1389 = vadd.f32 0.0, %v1388
        %v1390 = vpop.f32.mrb[0].mxu0
        %v1391 = vadd.f32 0.0, %v1390
        %1392 = vmatprep.mubr.f32.mxu0 0.0
        %1393 = vmatmul.mubr.f32.gmra.mrb[0].mxu0 %v1269
        %v1394 = vpop.f32.mrb[0].mxu0
        %v1395 = vadd.f32 0.0, %v1394
        %v1396 = vpop.f32.mrb[0].mxu0
        %v1397 = vadd.f32 0.0, %v1396
        %1398 = vmatprep.mubr.f32.mxu0 0.0
        %1399 = vmatmul.mubr.f32.gmra.mrb[0].mxu0 %v1272
        %v1400 = vpop.f32.mrb[0].mxu0
        %v1401 = vadd.f32 0.0, %v1400
        %v1402 = vpop.f32.mrb[0].mxu0
        %v1403 = vadd.f32 0.0, %v1402
        %1404 = vmatprep.mubr.f32.mxu0 0.0
        %1405 = vmatmul.mubr.f32.gmra.mrb[0].mxu0 %v1275
        %v1406 = vpop.f32.mrb[0].mxu0
        %v1407 = vadd.f32 0.0, %v1406
        %v1408 = vpop.f32.mrb[0].mxu0
        %v1409 = vadd.f32 0.0, %v1408
        %1410 = vmatprep.mubr.f32.mxu0 0.0
        %1411 = vmatmul.mubr.f32.gmra.mrb[0].mxu0 %v1278
        %v1412 = vpop.f32.mrb[0].mxu0
        %v1413 = vadd.f32 0.0, %v1412
        %v1414 = vpop.f32.mrb[0].mxu0
        %v1415 = vadd.f32 0.0, %v1414
        %1416 = vmatprep.mubr.f32.mxu0 0.0
        %1417 = vmatmul.mubr.f32.gmra.mrb[0].mxu0 %v1281
        %v1418 = vpop.f32.mrb[0].mxu0
        %v1419 = vadd.f32 0.0, %v1418
        %v1420 = vpop.f32.mrb[0].mxu0
        %v1421 = vadd.f32 0.0, %v1420
        %1422 = vmatprep.mubr.f32.mxu0 0.0
        %1423 = vmatmul.mubr.f32.gmra.mrb[0].mxu0 %v1284
        %v1424 = vpop.f32.mrb[0].mxu0
        %v1425 = vadd.f32 0.0, %v1424
        %v1426 = vpop.f32.mrb[0].mxu0
        %v1427 = vadd.f32 0.0, %v1426
        %1428 = vmatprep.mubr.f32.mxu0 0.0
        %1429 = vmatmul.mubr.f32.gmra.mrb[0].mxu0 %v1287
        %v1430 = vpop.f32.mrb[0].mxu0
        %v1431 = vadd.f32 0.0, %v1430
        %v1432 = vpop.f32.mrb[0].mxu0
        %v1433 = vadd.f32 0.0, %v1432
        %1434 = vmatprep.mubr.f32.mxu0 0.0
        %1435 = vmatmul.mubr.f32.gmra.mrb[0].mxu0 %v1290
        %v1436 = vpop.f32.mrb[0].mxu0
        %v1437 = vadd.f32 0.0, %v1436
        %v1438 = vpop.f32.mrb[0].mxu0
        %v1439 = vadd.f32 0.0, %v1438
        %1440 = vmatprep.mubr.f32.mxu0 0.0
        %1441 = vmatmul.mubr.f32.gmra.mrb[0].mxu0 %v1293
        %v1442 = vpop.f32.mrb[0].mxu0
        %v1443 = vadd.f32 0.0, %v1442
        %v1444 = vpop.f32.mrb[0].mxu0
        %v1445 = vadd.f32 0.0, %v1444
        %1446 = vmatprep.mubr.f32.mxu0 0.0
        %1447 = vmatmul.mubr.f32.gmra.mrb[0].mxu0 %v1296
        %v1448 = vpop.f32.mrb[0].mxu0
        %v1449 = vadd.f32 0.0, %v1448
        %v1450 = vpop.f32.mrb[0].mxu0
        %v1451 = vadd.f32 0.0, %v1450
        %1452 = vmatprep.mubr.f32.mxu0 0.0
        %1453 = vmatmul.mubr.f32.gmra.mrb[0].mxu0 %v1299
        %v1454 = vpop.f32.mrb[0].mxu0
        %v1455 = vadd.f32 0.0, %v1454
        %v1456 = vpop.f32.mrb[0].mxu0
        %v1457 = vadd.f32 0.0, %v1456
        %1458 = vmatprep.mubr.f32.mxu0 0.0
        %1459 = vmatmul.mubr.f32.gmra.mrb[0].mxu0 %v1302
        %v1460 = vpop.f32.mrb[0].mxu0
        %v1461 = vadd.f32 0.0, %v1460
        %v1462 = vpop.f32.mrb[0].mxu0
        %v1463 = vadd.f32 0.0, %v1462
        %1464 = vdwg.mxu0
        %1465 = vmatprep.subr.mxu0 0.0
        %1466 = vmatpush1.msra.mxu0 %v1215
        %1467 = vmatprep.subr.mxu0 0.0
        %1468 = vmatpush1.msra.mxu0 %v1216
        %1469 = vmatprep.subr.mxu0 0.0
        %1470 = vmatpush1.msra.mxu0 %v1217
        %1471 = vmatprep.subr.mxu0 0.0
        %1472 = vmatpush1.msra.mxu0 %v1218
        %1473 = vmatprep.subr.mxu0 0.0
        %1474 = vmatpush1.msra.mxu0 %v1219
        %1475 = vmatprep.subr.mxu0 0.0
        %1476 = vmatpush1.msra.mxu0 %v1220
        %1477 = vmatprep.subr.mxu0 0.0
        %1478 = vmatpush1.msra.mxu0 %v1221
        %1479 = vmatprep.subr.mxu0 0.0
        %1480 = vmatpush1.msra.mxu0 %v1222
        %1481 = vmatprep.subr.mxu0 0.0
        %1482 = vmatpush1.msra.mxu0 0.0
        %1483 = vmatprep.subr.mxu0 0.0
        %1484 = vmatpush1.msra.mxu0 0.0
        %1485 = vmatprep.subr.mxu0 0.0
        %1486 = vmatpush1.msra.mxu0 0.0
        %1487 = vmatprep.subr.mxu0 0.0
        %1488 = vmatpush1.msra.mxu0 0.0
        %1489 = vmatprep.subr.mxu0 0.0
        %1490 = vmatpush1.msra.mxu0 0.0
        %1491 = vmatprep.subr.mxu0 0.0
        %1492 = vmatpush1.msra.mxu0 0.0
        %1493 = vmatprep.subr.mxu0 0.0
        %1494 = vmatpush1.msra.mxu0 0.0
        %1495 = vmatprep.subr.mxu0 0.0
        %1496 = vmatpush1.msra.mxu0 0.0
        %1497 = vmatprep.subr.mxu0 0.0
        %1498 = vmatpush1.msra.mxu0 0.0
        %1499 = vmatprep.subr.mxu0 0.0
        %1500 = vmatpush1.msra.mxu0 0.0
        %1501 = vmatprep.subr.mxu0 0.0
        %1502 = vmatpush1.msra.mxu0 0.0
        %1503 = vmatprep.subr.mxu0 0.0
        %1504 = vmatpush1.msra.mxu0 0.0
        %1505 = vmatprep.subr.mxu0 0.0
        %1506 = vmatpush1.msra.mxu0 0.0
        %1507 = vmatprep.subr.mxu0 0.0
        %1508 = vmatpush1.msra.mxu0 0.0
        %1509 = vmatprep.subr.mxu0 0.0
        %1510 = vmatpush1.msra.mxu0 0.0
        %1511 = vmatprep.subr.mxu0 0.0
        %1512 = vmatpush1.msra.mxu0 0.0
        %1513 = vmatprep.subr.mxu0 0.0
        %1514 = vmatpush1.msra.mxu0 0.0
        %1515 = vmatprep.subr.mxu0 0.0
        %1516 = vmatpush1.msra.mxu0 0.0
        %1517 = vmatprep.subr.mxu0 0.0
        %1518 = vmatpush1.msra.mxu0 0.0
        %1519 = vmatprep.subr.mxu0 0.0
        %1520 = vmatpush1.msra.mxu0 0.0
        %1521 = vmatprep.subr.mxu0 0.0
        %1522 = vmatpush1.msra.mxu0 0.0
        %1523 = vmatprep.subr.mxu0 0.0
        %1524 = vmatpush1.msra.mxu0 0.0
        %1525 = vmatprep.subr.mxu0 0.0
        %1526 = vmatpush1.msra.mxu0 0.0
        %1527 = vmatprep.subr.mxu0 0.0
        %1528 = vmatpush1.msra.mxu0 0.0
        %1529 = vmatprep.mubr.f32.mxu0 0.0
        %1530 = vmatmul.mubr.f32.gmra.mrb[0].mxu0 %v1257
        %v1531 = vpop.f32.mrb[0].mxu0
        %v1532 = vadd.f32 0.0, %v1531
        %v1533 = vpop.f32.mrb[0].mxu0
        %1534 = vmatprep.mubr.f32.mxu0 0.0
        %1535 = vmatmul.mubr.f32.gmra.mrb[0].mxu0 %v1260
        %v1536 = vpop.f32.mrb[0].mxu0
        %v1537 = vadd.f32 0.0, %v1536
        %v1538 = vpop.f32.mrb[0].mxu0
        %1539 = vmatprep.mubr.f32.mxu0 0.0
        %1540 = vmatmul.mubr.f32.gmra.mrb[0].mxu0 %v1263
        %v1541 = vpop.f32.mrb[0].mxu0
        %v1542 = vadd.f32 0.0, %v1541
        %v1543 = vpop.f32.mrb[0].mxu0
        %1544 = vmatprep.mubr.f32.mxu0 0.0
        %1545 = vmatmul.mubr.f32.gmra.mrb[0].mxu0 %v1266
        %v1546 = vpop.f32.mrb[0].mxu0
        %v1547 = vadd.f32 0.0, %v1546
        %v1548 = vpop.f32.mrb[0].mxu0
        %1549 = vmatprep.mubr.f32.mxu0 0.0
        %1550 = vmatmul.mubr.f32.gmra.mrb[0].mxu0 %v1269
        %v1551 = vpop.f32.mrb[0].mxu0
        %v1552 = vadd.f32 0.0, %v1551
        %v1553 = vpop.f32.mrb[0].mxu0
        %1554 = vmatprep.mubr.f32.mxu0 0.0
        %1555 = vmatmul.mubr.f32.gmra.mrb[0].mxu0 %v1272
        %v1556 = vpop.f32.mrb[0].mxu0
        %v1557 = vadd.f32 0.0, %v1556
        %v1558 = vpop.f32.mrb[0].mxu0
        %1559 = vmatprep.mubr.f32.mxu0 0.0
        %1560 = vmatmul.mubr.f32.gmra.mrb[0].mxu0 %v1275
        %v1561 = vpop.f32.mrb[0].mxu0
        %v1562 = vadd.f32 0.0, %v1561
        %v1563 = vpop.f32.mrb[0].mxu0
        %1564 = vmatprep.mubr.f32.mxu0 0.0
        %1565 = vmatmul.mubr.f32.gmra.mrb[0].mxu0 %v1278
        %v1566 = vpop.f32.mrb[0].mxu0
        %v1567 = vadd.f32 0.0, %v1566
        %v1568 = vpop.f32.mrb[0].mxu0
        %1569 = vmatprep.mubr.f32.mxu0 0.0
        %1570 = vmatmul.mubr.f32.gmra.mrb[0].mxu0 %v1281
        %v1571 = vpop.f32.mrb[0].mxu0
        %v1572 = vadd.f32 0.0, %v1571
        %v1573 = vpop.f32.mrb[0].mxu0
        %1574 = vmatprep.mubr.f32.mxu0 0.0
        %1575 = vmatmul.mubr.f32.gmra.mrb[0].mxu0 %v1284
        %v1576 = vpop.f32.mrb[0].mxu0
        %v1577 = vadd.f32 0.0, %v1576
        %v1578 = vpop.f32.mrb[0].mxu0
        %1579 = vmatprep.mubr.f32.mxu0 0.0
        %1580 = vmatmul.mubr.f32.gmra.mrb[0].mxu0 %v1287
        %v1581 = vpop.f32.mrb[0].mxu0
        %v1582 = vadd.f32 0.0, %v1581
        %v1583 = vpop.f32.mrb[0].mxu0
        %1584 = vmatprep.mubr.f32.mxu0 0.0
        %1585 = vmatmul.mubr.f32.gmra.mrb[0].mxu0 %v1290
        %v1586 = vpop.f32.mrb[0].mxu0
        %v1587 = vadd.f32 0.0, %v1586
        %v1588 = vpop.f32.mrb[0].mxu0
        %1589 = vmatprep.mubr.f32.mxu0 0.0
        %1590 = vmatmul.mubr.f32.gmra.mrb[0].mxu0 %v1293
        %v1591 = vpop.f32.mrb[0].mxu0
        %v1592 = vadd.f32 0.0, %v1591
        %v1593 = vpop.f32.mrb[0].mxu0
        %1594 = vmatprep.mubr.f32.mxu0 0.0
        %1595 = vmatmul.mubr.f32.gmra.mrb[0].mxu0 %v1296
        %v1596 = vpop.f32.mrb[0].mxu0
        %v1597 = vadd.f32 0.0, %v1596
        %v1598 = vpop.f32.mrb[0].mxu0
        %1599 = vmatprep.mubr.f32.mxu0 0.0
        %1600 = vmatmul.mubr.f32.gmra.mrb[0].mxu0 %v1299
        %v1601 = vpop.f32.mrb[0].mxu0
        %v1602 = vadd.f32 0.0, %v1601
        %v1603 = vpop.f32.mrb[0].mxu0
        %1604 = vmatprep.mubr.f32.mxu0 0.0
        %1605 = vmatmul.mubr.f32.gmra.mrb[0].mxu0 %v1302
        %v1606 = vpop.f32.mrb[0].mxu0
        %v1607 = vadd.f32 0.0, %v1606
        %v1608 = vpop.f32.mrb[0].mxu0
        %1609 = vdwg.mxu0
        %v1610 = vld [vmem:[%s416] sm:$0xff]
        %v1611 = vld [vmem:[%s416 + $0x8] sm:$0xff]
        %v1612 = vld [vmem:[%s416 + $0x10] sm:$0xff]
        %v1613 = vld [vmem:[%s416 + $0x18] sm:$0xff]
        %v1614 = vld [vmem:[%s416 + $0x20] sm:$0xff]
        %v1615 = vld [vmem:[%s416 + $0x28] sm:$0xff]
        %v1616 = vld [vmem:[%s416 + $0x30] sm:$0xff]
        %v1617 = vld [vmem:[%s416 + $0x38] sm:$0xff]
        %v1618 = vld [vmem:[%s416 + $0x40] sm:$0xff]
        %v1619 = vld [vmem:[%s416 + $0x48] sm:$0xff]
        %v1620 = vld [vmem:[%s416 + $0x50] sm:$0xff]
        %v1621 = vld [vmem:[%s416 + $0x58] sm:$0xff]
        %v1622 = vld [vmem:[%s416 + $0x60] sm:$0xff]
        %v1623 = vld [vmem:[%s416 + $0x68] sm:$0xff]
        %v1624 = vld [vmem:[%s416 + $0x70] sm:$0xff]
        %v1625 = vld [vmem:[%s416 + $0x78] sm:$0xff]
        %v1626 = vadd.f32 %v1610, %v1371
        %v1627 = vadd.f32 %v1611, %v1377
        %v1628 = vadd.f32 %v1612, %v1383
        %v1629 = vadd.f32 %v1613, %v1389
        %v1630 = vadd.f32 %v1614, %v1395
        %v1631 = vadd.f32 %v1615, %v1401
        %v1632 = vadd.f32 %v1616, %v1407
        %v1633 = vadd.f32 %v1617, %v1413
        %v1634 = vadd.f32 %v1618, %v1419
        %v1635 = vadd.f32 %v1619, %v1425
        %v1636 = vadd.f32 %v1620, %v1431
        %v1637 = vadd.f32 %v1621, %v1437
        %v1638 = vadd.f32 %v1622, %v1443
        %v1639 = vadd.f32 %v1623, %v1449
        %v1640 = vadd.f32 %v1624, %v1455
        %v1641 = vadd.f32 %v1625, %v1461
        %1642 = vst [vmem:[%s416] sm:$0xff] %v1626
        %1643 = vst [vmem:[%s416 + $0x8] sm:$0xff] %v1627
        %1644 = vst [vmem:[%s416 + $0x10] sm:$0xff] %v1628
        %1645 = vst [vmem:[%s416 + $0x18] sm:$0xff] %v1629
        %1646 = vst [vmem:[%s416 + $0x20] sm:$0xff] %v1630
        %1647 = vst [vmem:[%s416 + $0x28] sm:$0xff] %v1631
        %1648 = vst [vmem:[%s416 + $0x30] sm:$0xff] %v1632
        %1649 = vst [vmem:[%s416 + $0x38] sm:$0xff] %v1633
        %1650 = vst [vmem:[%s416 + $0x40] sm:$0xff] %v1634
        %1651 = vst [vmem:[%s416 + $0x48] sm:$0xff] %v1635
        %1652 = vst [vmem:[%s416 + $0x50] sm:$0xff] %v1636
        %1653 = vst [vmem:[%s416 + $0x58] sm:$0xff] %v1637
        %1654 = vst [vmem:[%s416 + $0x60] sm:$0xff] %v1638
        %1655 = vst [vmem:[%s416 + $0x68] sm:$0xff] %v1639
        %1656 = vst [vmem:[%s416 + $0x70] sm:$0xff] %v1640
        %1657 = vst [vmem:[%s416 + $0x78] sm:$0xff] %v1641
        %v1658 = vld [vmem:[%s423] sm:$0xff]
        %v1659 = vld [vmem:[%s423 + $0x8] sm:$0xff]
        %v1660 = vld [vmem:[%s423 + $0x10] sm:$0xff]
        %v1661 = vld [vmem:[%s423 + $0x18] sm:$0xff]
        %v1662 = vld [vmem:[%s423 + $0x20] sm:$0xff]
        %v1663 = vld [vmem:[%s423 + $0x28] sm:$0xff]
        %v1664 = vld [vmem:[%s423 + $0x30] sm:$0xff]
        %v1665 = vld [vmem:[%s423 + $0x38] sm:$0xff]
        %v1666 = vld [vmem:[%s423 + $0x40] sm:$0xff]
        %v1667 = vld [vmem:[%s423 + $0x48] sm:$0xff]
        %v1668 = vld [vmem:[%s423 + $0x50] sm:$0xff]
        %v1669 = vld [vmem:[%s423 + $0x58] sm:$0xff]
        %v1670 = vld [vmem:[%s423 + $0x60] sm:$0xff]
        %v1671 = vld [vmem:[%s423 + $0x68] sm:$0xff]
        %v1672 = vld [vmem:[%s423 + $0x70] sm:$0xff]
        %v1673 = vld [vmem:[%s423 + $0x78] sm:$0xff]
        %v1674 = vadd.f32 %v1658, %v1373
        %v1675 = vadd.f32 %v1659, %v1379
        %v1676 = vadd.f32 %v1660, %v1385
        %v1677 = vadd.f32 %v1661, %v1391
        %v1678 = vadd.f32 %v1662, %v1397
        %v1679 = vadd.f32 %v1663, %v1403
        %v1680 = vadd.f32 %v1664, %v1409
        %v1681 = vadd.f32 %v1665, %v1415
        %v1682 = vadd.f32 %v1666, %v1421
        %v1683 = vadd.f32 %v1667, %v1427
        %v1684 = vadd.f32 %v1668, %v1433
        %v1685 = vadd.f32 %v1669, %v1439
        %v1686 = vadd.f32 %v1670, %v1445
        %v1687 = vadd.f32 %v1671, %v1451
        %v1688 = vadd.f32 %v1672, %v1457
        %v1689 = vadd.f32 %v1673, %v1463
        %1690 = vst [vmem:[%s423] sm:$0xff] %v1674
        %1691 = vst [vmem:[%s423 + $0x8] sm:$0xff] %v1675
        %1692 = vst [vmem:[%s423 + $0x10] sm:$0xff] %v1676
        %1693 = vst [vmem:[%s423 + $0x18] sm:$0xff] %v1677
        %1694 = vst [vmem:[%s423 + $0x20] sm:$0xff] %v1678
        %1695 = vst [vmem:[%s423 + $0x28] sm:$0xff] %v1679
        %1696 = vst [vmem:[%s423 + $0x30] sm:$0xff] %v1680
        %1697 = vst [vmem:[%s423 + $0x38] sm:$0xff] %v1681
        %1698 = vst [vmem:[%s423 + $0x40] sm:$0xff] %v1682
        %1699 = vst [vmem:[%s423 + $0x48] sm:$0xff] %v1683
        %1700 = vst [vmem:[%s423 + $0x50] sm:$0xff] %v1684
        %1701 = vst [vmem:[%s423 + $0x58] sm:$0xff] %v1685
        %1702 = vst [vmem:[%s423 + $0x60] sm:$0xff] %v1686
        %1703 = vst [vmem:[%s423 + $0x68] sm:$0xff] %v1687
        %1704 = vst [vmem:[%s423 + $0x70] sm:$0xff] %v1688
        %1705 = vst [vmem:[%s423 + $0x78] sm:$0xff] %v1689
        %v1706 = vld [vmem:[%s430] sm:$0xff]
        %v1707 = vld [vmem:[%s430 + $0x8] sm:$0xff]
        %v1708 = vld [vmem:[%s430 + $0x10] sm:$0xff]
        %v1709 = vld [vmem:[%s430 + $0x18] sm:$0xff]
        %v1710 = vld [vmem:[%s430 + $0x20] sm:$0xff]
        %v1711 = vld [vmem:[%s430 + $0x28] sm:$0xff]
        %v1712 = vld [vmem:[%s430 + $0x30] sm:$0xff]
        %v1713 = vld [vmem:[%s430 + $0x38] sm:$0xff]
        %v1714 = vld [vmem:[%s430 + $0x40] sm:$0xff]
        %v1715 = vld [vmem:[%s430 + $0x48] sm:$0xff]
        %v1716 = vld [vmem:[%s430 + $0x50] sm:$0xff]
        %v1717 = vld [vmem:[%s430 + $0x58] sm:$0xff]
        %v1718 = vld [vmem:[%s430 + $0x60] sm:$0xff]
        %v1719 = vld [vmem:[%s430 + $0x68] sm:$0xff]
        %v1720 = vld [vmem:[%s430 + $0x70] sm:$0xff]
        %v1721 = vld [vmem:[%s430 + $0x78] sm:$0xff]
        %v1722 = vadd.f32 %v1706, %v1532
        %v1723 = vadd.f32 %v1707, %v1537
        %v1724 = vadd.f32 %v1708, %v1542
        %v1725 = vadd.f32 %v1709, %v1547
        %v1726 = vadd.f32 %v1710, %v1552
        %v1727 = vadd.f32 %v1711, %v1557
        %v1728 = vadd.f32 %v1712, %v1562
        %v1729 = vadd.f32 %v1713, %v1567
        %v1730 = vadd.f32 %v1714, %v1572
        %v1731 = vadd.f32 %v1715, %v1577
        %v1732 = vadd.f32 %v1716, %v1582
        %v1733 = vadd.f32 %v1717, %v1587
        %v1734 = vadd.f32 %v1718, %v1592
        %v1735 = vadd.f32 %v1719, %v1597
        %v1736 = vadd.f32 %v1720, %v1602
        %v1737 = vadd.f32 %v1721, %v1607
        %1738 = vst [vmem:[%s430] sm:$0xff] %v1722
        %1739 = vst [vmem:[%s430 + $0x8] sm:$0xff] %v1723
        %1740 = vst [vmem:[%s430 + $0x10] sm:$0xff] %v1724
        %1741 = vst [vmem:[%s430 + $0x18] sm:$0xff] %v1725
        %1742 = vst [vmem:[%s430 + $0x20] sm:$0xff] %v1726
        %1743 = vst [vmem:[%s430 + $0x28] sm:$0xff] %v1727
        %1744 = vst [vmem:[%s430 + $0x30] sm:$0xff] %v1728
        %1745 = vst [vmem:[%s430 + $0x38] sm:$0xff] %v1729
        %1746 = vst [vmem:[%s430 + $0x40] sm:$0xff] %v1730
        %1747 = vst [vmem:[%s430 + $0x48] sm:$0xff] %v1731
        %1748 = vst [vmem:[%s430 + $0x50] sm:$0xff] %v1732
        %1749 = vst [vmem:[%s430 + $0x58] sm:$0xff] %v1733
        %1750 = vst [vmem:[%s430 + $0x60] sm:$0xff] %v1734
        %1751 = vst [vmem:[%s430 + $0x68] sm:$0xff] %v1735
        %1752 = vst [vmem:[%s430 + $0x70] sm:$0xff] %v1736
        %1753 = vst [vmem:[%s430 + $0x78] sm:$0xff] %v1737
        // Predicated region
        $region53: #{tpu_custom_call.1} parent=43 // pred_check
          %p1754 = pneg %p459
        $region54: #{tpu_custom_call.1} parent=43 // pred_check_branch
          %1756 = sbr.rel (%p1754) target = $region56
        $region55: #{tpu_custom_call.1} parent=43 // pred_region
          %v1757 = vld [vmem:[%s416] sm:$0xff]
          %v1758 = vld [vmem:[%s416 + $0x8] sm:$0xff]
          %v1759 = vld [vmem:[%s416 + $0x10] sm:$0xff]
          %v1760 = vld [vmem:[%s416 + $0x18] sm:$0xff]
          %v1761 = vld [vmem:[%s416 + $0x20] sm:$0xff]
          %v1762 = vld [vmem:[%s416 + $0x28] sm:$0xff]
          %v1763 = vld [vmem:[%s416 + $0x30] sm:$0xff]
          %v1764 = vld [vmem:[%s416 + $0x38] sm:$0xff]
          %v1765 = vld [vmem:[%s416 + $0x40] sm:$0xff]
          %v1766 = vld [vmem:[%s416 + $0x48] sm:$0xff]
          %v1767 = vld [vmem:[%s416 + $0x50] sm:$0xff]
          %v1768 = vld [vmem:[%s416 + $0x58] sm:$0xff]
          %v1769 = vld [vmem:[%s416 + $0x60] sm:$0xff]
          %v1770 = vld [vmem:[%s416 + $0x68] sm:$0xff]
          %v1771 = vld [vmem:[%s416 + $0x70] sm:$0xff]
          %v1772 = vld [vmem:[%s416 + $0x78] sm:$0xff]
          %1773 = vxpose.xlu0.b32.start [1/16] %v1757, 128
          %1774 = vxpose.xlu0.b32.cont [2/16] %v1758, 128
          %1775 = vxpose.xlu0.b32.cont [3/16] %v1759, 128
          %1776 = vxpose.xlu0.b32.cont [4/16] %v1760, 128
          %1777 = vxpose.xlu0.b32.cont [5/16] %v1761, 128
          %1778 = vxpose.xlu0.b32.cont [6/16] %v1762, 128
          %1779 = vxpose.xlu0.b32.cont [7/16] %v1763, 128
          %1780 = vxpose.xlu0.b32.cont [8/16] %v1764, 128
          %1781 = vxpose.xlu0.b32.cont [9/16] %v1765, 128
          %1782 = vxpose.xlu0.b32.cont [10/16] %v1766, 128
          %1783 = vxpose.xlu0.b32.cont [11/16] %v1767, 128
          %1784 = vxpose.xlu0.b32.cont [12/16] %v1768, 128
          %1785 = vxpose.xlu0.b32.cont [13/16] %v1769, 128
          %1786 = vxpose.xlu0.b32.cont [14/16] %v1770, 128
          %1787 = vxpose.xlu0.b32.cont [15/16] %v1771, 128
          %1788 = vxpose.xlu0.b32.end [16/16] %v1772, 128
          %v1789 = vpop.trf.xlu0
          %v1790 = vpop.trf.xlu0
          %v1791 = vpop.trf.xlu0
          %v1792 = vpop.trf.xlu0
          %v1793 = vpop.trf.xlu0
          %v1794 = vpop.trf.xlu0
          %v1795 = vpop.trf.xlu0
          %v1796 = vpop.trf.xlu0
          %v1797 = vpop.trf.xlu0
          %v1798 = vpop.trf.xlu0
          %v1799 = vpop.trf.xlu0
          %v1800 = vpop.trf.xlu0
          %v1801 = vpop.trf.xlu0
          %v1802 = vpop.trf.xlu0
          %v1803 = vpop.trf.xlu0
          %v1804 = vpop.trf.xlu0
          %v1805 = vadd.f32 %v1757, %v1789
          %v1806 = vadd.f32 %v1758, %v1790
          %v1807 = vadd.f32 %v1759, %v1791
          %v1808 = vadd.f32 %v1760, %v1792
          %v1809 = vadd.f32 %v1761, %v1793
          %v1810 = vadd.f32 %v1762, %v1794
          %v1811 = vadd.f32 %v1763, %v1795
          %v1812 = vadd.f32 %v1764, %v1796
          %v1813 = vadd.f32 %v1765, %v1797
          %v1814 = vadd.f32 %v1766, %v1798
          %v1815 = vadd.f32 %v1767, %v1799
          %v1816 = vadd.f32 %v1768, %v1800
          %v1817 = vadd.f32 %v1769, %v1801
          %v1818 = vadd.f32 %v1770, %v1802
          %v1819 = vadd.f32 %v1771, %v1803
          %v1820 = vadd.f32 %v1772, %v1804
          %1821 = vst [vmem:[%s416] sm:$0xff] %v1805
          %1822 = vst [vmem:[%s416 + $0x8] sm:$0xff] %v1806
          %1823 = vst [vmem:[%s416 + $0x10] sm:$0xff] %v1807
          %1824 = vst [vmem:[%s416 + $0x18] sm:$0xff] %v1808
          %1825 = vst [vmem:[%s416 + $0x20] sm:$0xff] %v1809
          %1826 = vst [vmem:[%s416 + $0x28] sm:$0xff] %v1810
          %1827 = vst [vmem:[%s416 + $0x30] sm:$0xff] %v1811
          %1828 = vst [vmem:[%s416 + $0x38] sm:$0xff] %v1812
          %1829 = vst [vmem:[%s416 + $0x40] sm:$0xff] %v1813
          %1830 = vst [vmem:[%s416 + $0x48] sm:$0xff] %v1814
          %1831 = vst [vmem:[%s416 + $0x50] sm:$0xff] %v1815
          %1832 = vst [vmem:[%s416 + $0x58] sm:$0xff] %v1816
          %1833 = vst [vmem:[%s416 + $0x60] sm:$0xff] %v1817
          %1834 = vst [vmem:[%s416 + $0x68] sm:$0xff] %v1818
          %1835 = vst [vmem:[%s416 + $0x70] sm:$0xff] %v1819
          %1836 = vst [vmem:[%s416 + $0x78] sm:$0xff] %v1820
          %v1837 = vld [vmem:[%s423] sm:$0xff]
          %v1838 = vld [vmem:[%s423 + $0x8] sm:$0xff]
          %v1839 = vld [vmem:[%s423 + $0x10] sm:$0xff]
          %v1840 = vld [vmem:[%s423 + $0x18] sm:$0xff]
          %v1841 = vld [vmem:[%s423 + $0x20] sm:$0xff]
          %v1842 = vld [vmem:[%s423 + $0x28] sm:$0xff]
          %v1843 = vld [vmem:[%s423 + $0x30] sm:$0xff]
          %v1844 = vld [vmem:[%s423 + $0x38] sm:$0xff]
          %v1845 = vld [vmem:[%s423 + $0x40] sm:$0xff]
          %v1846 = vld [vmem:[%s423 + $0x48] sm:$0xff]
          %v1847 = vld [vmem:[%s423 + $0x50] sm:$0xff]
          %v1848 = vld [vmem:[%s423 + $0x58] sm:$0xff]
          %v1849 = vld [vmem:[%s423 + $0x60] sm:$0xff]
          %v1850 = vld [vmem:[%s423 + $0x68] sm:$0xff]
          %v1851 = vld [vmem:[%s423 + $0x70] sm:$0xff]
          %v1852 = vld [vmem:[%s423 + $0x78] sm:$0xff]
          %1853 = vxpose.xlu0.b32.start [1/16] %v1837, 128
          %1854 = vxpose.xlu0.b32.cont [2/16] %v1838, 128
          %1855 = vxpose.xlu0.b32.cont [3/16] %v1839, 128
          %1856 = vxpose.xlu0.b32.cont [4/16] %v1840, 128
          %1857 = vxpose.xlu0.b32.cont [5/16] %v1841, 128
          %1858 = vxpose.xlu0.b32.cont [6/16] %v1842, 128
          %1859 = vxpose.xlu0.b32.cont [7/16] %v1843, 128
          %1860 = vxpose.xlu0.b32.cont [8/16] %v1844, 128
          %1861 = vxpose.xlu0.b32.cont [9/16] %v1845, 128
          %1862 = vxpose.xlu0.b32.cont [10/16] %v1846, 128
          %1863 = vxpose.xlu0.b32.cont [11/16] %v1847, 128
          %1864 = vxpose.xlu0.b32.cont [12/16] %v1848, 128
          %1865 = vxpose.xlu0.b32.cont [13/16] %v1849, 128
          %1866 = vxpose.xlu0.b32.cont [14/16] %v1850, 128
          %1867 = vxpose.xlu0.b32.cont [15/16] %v1851, 128
          %1868 = vxpose.xlu0.b32.end [16/16] %v1852, 128
          %v1869 = vpop.trf.xlu0
          %v1870 = vpop.trf.xlu0
          %v1871 = vpop.trf.xlu0
          %v1872 = vpop.trf.xlu0
          %v1873 = vpop.trf.xlu0
          %v1874 = vpop.trf.xlu0
          %v1875 = vpop.trf.xlu0
          %v1876 = vpop.trf.xlu0
          %v1877 = vpop.trf.xlu0
          %v1878 = vpop.trf.xlu0
          %v1879 = vpop.trf.xlu0
          %v1880 = vpop.trf.xlu0
          %v1881 = vpop.trf.xlu0
          %v1882 = vpop.trf.xlu0
          %v1883 = vpop.trf.xlu0
          %v1884 = vpop.trf.xlu0
          %v1885 = vadd.f32 %v1837, %v1869
          %v1886 = vadd.f32 %v1838, %v1870
          %v1887 = vadd.f32 %v1839, %v1871
          %v1888 = vadd.f32 %v1840, %v1872
          %v1889 = vadd.f32 %v1841, %v1873
          %v1890 = vadd.f32 %v1842, %v1874
          %v1891 = vadd.f32 %v1843, %v1875
          %v1892 = vadd.f32 %v1844, %v1876
          %v1893 = vadd.f32 %v1845, %v1877
          %v1894 = vadd.f32 %v1846, %v1878
          %v1895 = vadd.f32 %v1847, %v1879
          %v1896 = vadd.f32 %v1848, %v1880
          %v1897 = vadd.f32 %v1849, %v1881
          %v1898 = vadd.f32 %v1850, %v1882
          %v1899 = vadd.f32 %v1851, %v1883
          %v1900 = vadd.f32 %v1852, %v1884
          %1901 = vst [vmem:[%s423] sm:$0xff] %v1885
          %1902 = vst [vmem:[%s423 + $0x8] sm:$0xff] %v1886
          %1903 = vst [vmem:[%s423 + $0x10] sm:$0xff] %v1887
          %1904 = vst [vmem:[%s423 + $0x18] sm:$0xff] %v1888
          %1905 = vst [vmem:[%s423 + $0x20] sm:$0xff] %v1889
          %1906 = vst [vmem:[%s423 + $0x28] sm:$0xff] %v1890
          %1907 = vst [vmem:[%s423 + $0x30] sm:$0xff] %v1891
          %1908 = vst [vmem:[%s423 + $0x38] sm:$0xff] %v1892
          %1909 = vst [vmem:[%s423 + $0x40] sm:$0xff] %v1893
          %1910 = vst [vmem:[%s423 + $0x48] sm:$0xff] %v1894
          %1911 = vst [vmem:[%s423 + $0x50] sm:$0xff] %v1895
          %1912 = vst [vmem:[%s423 + $0x58] sm:$0xff] %v1896
          %1913 = vst [vmem:[%s423 + $0x60] sm:$0xff] %v1897
          %1914 = vst [vmem:[%s423 + $0x68] sm:$0xff] %v1898
          %1915 = vst [vmem:[%s423 + $0x70] sm:$0xff] %v1899
          %1916 = vst [vmem:[%s423 + $0x78] sm:$0xff] %v1900
        $region56: #{tpu_custom_call.1} parent=43 // pred_fallthru
          _
        %s1917 = sand.u32 %s205, 1
        %s1918 = scalar_lea.sflag [#allocation4], %s1917
        %s1919 = sand.u32 %s205, 1
        %s1920 = smul.addr %s1919, 128
        %s1921 = scalar_lea.vmem [#allocation5], %s1920
        %s1922 = sand.u32 %s29, 1
        %s1923 = scalar_lea.sflag [#allocation7], %s1922
        %s1924 = sand.u32 %s231, 1
        %s1925 = smul.addr %s1924, 128
        %s1926 = scalar_lea.vmem [#allocation6], %s1925
        %s1927 = sand.u32 %s29, 1
        %s1928 = scalar_lea.sflag [#allocation7], %s1927
        %s1929 = sand.u32 %s257, 1
        %s1930 = smul.addr %s1929, 128
        %s1931 = scalar_lea.vmem [#allocation8], %s1930
        // Predicated region
        $region57: #{tpu_custom_call.1} parent=43 // pred_check
          %p1932 = pneg %p215
        $region58: #{tpu_custom_call.1} parent=43 // pred_check_branch
          %1934 = sbr.rel (%p1932) target = $region60
        $region59: #{tpu_custom_call.1} parent=43 // pred_region
          %s1936 = ssub.s32 2048, 2048
          %1937 = vsyncadd %s1918, %s1936
          %s1938 = smul.addr %s33, 16
          %s1939 = smul.addr %s1938, 128
          %s1940 = scalar_lea.hbm %s6, %s1939
          %s1941 = sshll.u32 %s1921, 4
          %s1942 = int_to_ptr.vmem [resolvable:$true] %s1941
          %1947 = dma.vmem_to_hbm [thread:$0]  %s1942, 2048, %s1940, %s1918, 128, 128, 8
        $region60: #{tpu_custom_call.1} parent=43 // pred_fallthru
          _
        // Predicated region
        $region61: #{tpu_custom_call.1} parent=43 // pred_check
          %p1948 = pneg %p241
        $region62: #{tpu_custom_call.1} parent=43 // pred_check_branch
          %1950 = sbr.rel (%p1948) target = $region64
        $region63: #{tpu_custom_call.1} parent=43 // pred_region
          %s1952 = ssub.s32 2048, 2048
          %1953 = vsyncadd %s1923, %s1952
          %s1954 = smul.addr %s33, 16
          %s1955 = smul.addr %s1954, 128
          %s1956 = scalar_lea.hbm %s7, %s1955
          %s1957 = sshll.u32 %s1926, 4
          %s1958 = int_to_ptr.vmem [resolvable:$true] %s1957
          %1963 = dma.vmem_to_hbm [thread:$0]  %s1958, 2048, %s1956, %s1923, 128, 128, 8
        $region64: #{tpu_custom_call.1} parent=43 // pred_fallthru
          _
        // Predicated region
        $region65: #{tpu_custom_call.1} parent=43 // pred_check
          %p1964 = pneg %p267
        $region66: #{tpu_custom_call.1} parent=43 // pred_check_branch
          %1966 = sbr.rel (%p1964) target = $region68
        $region67: #{tpu_custom_call.1} parent=43 // pred_region
          %s1968 = ssub.s32 2048, 2048
          %1969 = vsyncadd %s1928, %s1968
          %s1970 = smul.addr %s33, 16
          %s1971 = smul.addr %s1970, 128
          %s1972 = scalar_lea.hbm %s8, %s1971
          %s1973 = sshll.u32 %s1931, 4
          %s1974 = int_to_ptr.vmem [resolvable:$true] %s1973
          %1979 = dma.vmem_to_hbm [thread:$0]  %s1974, 2048, %s1972, %s1928, 128, 128, 8
        $region68: #{tpu_custom_call.1} parent=43 // pred_fallthru
          _
      $region44: #{tpu_custom_call.1} parent=5 // pred_fallthru
        _
      %p1980 = scmp.le.s32.totalorder 2, %s24
      // Predicated region
      $region69: #{tpu_custom_call.1} parent=5 // pred_check
        %p1981 = pneg %p1980
      $region70: #{tpu_custom_call.1} parent=5 // pred_check_branch
        %1983 = sbr.rel (%p1981) target = $region72
      $region71: #{tpu_custom_call.1} parent=5 // pred_region
        %s1984 = ssub.s32 %s24, 2
        // Predicated region
        $region73: #{tpu_custom_call.1} parent=71 // pred_check
          %p1985 = pneg %p221
        $region74: #{tpu_custom_call.1} parent=71 // pred_check_branch
          %1987 = sbr.rel (%p1985) target = $region76
        $region75: #{tpu_custom_call.1} parent=71 // pred_region
          %s1988 = sand.u32 %s206, 1
          %s1989 = scalar_lea.sflag [#allocation4], %s1988
          %s1990 = sand.u32 %s206, 1
          %s1991 = smul.addr %s1990, 128
          %s1992 = scalar_lea.vmem [#allocation5], %s1991
          %1993 = dma.done %s1989, 2048
        $region76: #{tpu_custom_call.1} parent=71 // pred_fallthru
          _
        // Predicated region
        $region77: #{tpu_custom_call.1} parent=71 // pred_check
          %p1994 = pneg %p247
        $region78: #{tpu_custom_call.1} parent=71 // pred_check_branch
          %1996 = sbr.rel (%p1994) target = $region80
        $region79: #{tpu_custom_call.1} parent=71 // pred_region
          %s1997 = sand.u32 %s30, 1
          %s1998 = scalar_lea.sflag [#allocation7], %s1997
          %s1999 = sand.u32 %s232, 1
          %s2000 = smul.addr %s1999, 128
          %s2001 = scalar_lea.vmem [#allocation6], %s2000
          %2002 = dma.done %s1998, 2048
        $region80: #{tpu_custom_call.1} parent=71 // pred_fallthru
          _
        // Predicated region
        $region81: #{tpu_custom_call.1} parent=71 // pred_check
          %p2003 = pneg %p273
        $region82: #{tpu_custom_call.1} parent=71 // pred_check_branch
          %2005 = sbr.rel (%p2003) target = $region84
        $region83: #{tpu_custom_call.1} parent=71 // pred_region
          %s2006 = sand.u32 %s30, 1
          %s2007 = scalar_lea.sflag [#allocation7], %s2006
          %s2008 = sand.u32 %s258, 1
          %s2009 = smul.addr %s2008, 128
          %s2010 = scalar_lea.vmem [#allocation8], %s2009
          %2011 = dma.done %s2007, 2048
        $region84: #{tpu_custom_call.1} parent=71 // pred_fallthru
          _
      $region72: #{tpu_custom_call.1} parent=5 // pred_fallthru
        _
    $region6: #{tpu_custom_call.1} parent=1 // loop_footer
      %s28 = sadd.s32 1, %s24
    $region7: #{tpu_custom_call.1} parent=1 // loop_footer_branch
      %23 = sbr.rel target = $region3
    $region8: #{tpu_custom_call.1} parent=1 // loop_exit
      _
    %2012 = vsyncpa [#allocation3], 1
    %s2013 = scalar_lea.sflag [#allocation3], 1
    %2014 = vsyncpa %s2013, 1
    %2015 = vsyncpa [#allocation4], 1
    %s2016 = scalar_lea.sflag [#allocation4], 1
    %2017 = vsyncpa %s2016, 1
    %2018 = vsyncpa [#allocation7], 1
    %s2019 = scalar_lea.sflag [#allocation7], 1
    %2020 = vsyncpa %s2019, 1

</llo_original>
